<compile_context>
chip_gen: v5e
topology: v5e:2x2
jax: 0.10.0
libtpu: 0.0.40
codegen_flags: <defaults>
</compile_context>

<pallas_src>
import functools

import jax
import jax.numpy as jnp
from jax.experimental import pallas as pl
from jax.experimental.pallas import tpu as pltpu

LN_EPS = 1e-12  # BERT LayerNorm eps


def _layernorm(x, gamma, beta):
    mu = jnp.mean(x, axis=-1, keepdims=True)
    var = jnp.mean((x - mu) ** 2, axis=-1, keepdims=True)
    return (x - mu) * jax.lax.rsqrt(var + LN_EPS) * gamma + beta


# ---------------------------------------------------------------------------
# The single fused kernel: one grid step = (batch element b, encoder layer l).
#   l == 0          : also applies the embedding LayerNorm (initializes the carry)
#   every l         : one full BERT encoder layer on the VMEM-resident residual stream
#   l == L - 1      : also runs the visn MLP + classification head, writes logits slab
# ---------------------------------------------------------------------------
def fused_joint_kernel(num_heads, num_layers, bertonly,
                       x_ref, mask_ref, embg_ref, embb_ref,
                       wqkv_ref, bqkv_ref, wo_ref, bo_ref,
                       ln1g_ref, ln1b_ref, w1_ref, b1_ref,
                       w2_ref, b2_ref, ln2g_ref, ln2b_ref,
                       *rest):
    if bertonly:
        (hw_ref, hb_ref,
         o_ref, h_ref, qkv_ref, heads_ref, ctx_ref) = rest
    else:
        (visn_ref, vw1_ref, vb1_ref, vw2_ref, vb2_ref,
         hwl_ref, hwv_ref, hb_ref,
         o_ref, h_ref, qkv_ref, heads_ref, ctx_ref) = rest

    l = pl.program_id(1)
    S, H = h_ref.shape
    hd = H // num_heads

    # ---- layer 0: fused embedding LayerNorm, initialize the VMEM-resident residual ----
    @pl.when(l == 0)
    def _():
        h_ref[...] = _layernorm(x_ref[0].astype(jnp.float32),
                                embg_ref[...], embb_ref[...])

    h = h_ref[...]                                   # (S, H) f32 residual stream
    h_bf = h.astype(jnp.bfloat16)

    # ---- self-attention ----
    # One wide QKV matmul (MXU N = 3H); 1/sqrt(hd) already folded into the Q columns.
    qkv = jnp.dot(h_bf, wqkv_ref[0], preferred_element_type=jnp.float32) + bqkv_ref[0]
    qkv_ref[...] = qkv.astype(jnp.bfloat16)          # (S, 3H) bf16 staging
    # Head split via VMEM window copies (memory-level slicing, no vreg relayout).
    # Column order is [q_h0..q_h{n-1} | k_h0.. | v_h0..], each hd columns wide.
    for i in range(3 * num_heads):
        heads_ref[i] = qkv_ref[:, i * hd:(i + 1) * hd]
    q = heads_ref[0:num_heads]                       # (nh, S, hd) bf16
    k = heads_ref[num_heads:2 * num_heads]
    v = heads_ref[2 * num_heads:3 * num_heads]

    scores = jnp.einsum('nqd,nkd->nqk', q, k,
                        preferred_element_type=jnp.float32)          # (nh, S, S) f32
    scores = scores + mask_ref[0][None]              # additive mask bias (1, 1, S)
    scores = scores - jnp.max(scores, axis=-1, keepdims=True)
    p = jnp.exp(scores)
    p = p * pl.reciprocal(jnp.sum(p, axis=-1, keepdims=True), approx=True)   # EUP

    ctx = jnp.einsum('nqk,nkd->nqd', p.astype(jnp.bfloat16), v,
                     preferred_element_type=jnp.float32)             # (nh, S, hd)
    # Pack heads back into a head-major (S, H) slab so the out-projection does the head
    # reduction inside the MXU contraction (K = nh*hd = H): no (nh,S,H) f32 intermediate.
    for n in range(num_heads):
        ctx_ref[:, n * hd:(n + 1) * hd] = ctx[n].astype(jnp.bfloat16)
    attn_out = jnp.dot(ctx_ref[...], wo_ref[0],
                       preferred_element_type=jnp.float32) + bo_ref[0]
    x1 = _layernorm(h + attn_out, ln1g_ref[0], ln1b_ref[0])

    # ---- FFN ----
    h1 = jnp.dot(x1.astype(jnp.bfloat16), w1_ref[0],
                 preferred_element_type=jnp.float32) + b1_ref[0]
    # TODO(synk): HF BERT uses exact (erf) GELU; tanh approx used for robust Mosaic lowering.
    h1 = jax.nn.gelu(h1, approximate=True)
    ffn = jnp.dot(h1.astype(jnp.bfloat16), w2_ref[0],
                  preferred_element_type=jnp.float32) + b2_ref[0]
    x2 = _layernorm(x1 + ffn, ln2g_ref[0], ln2b_ref[0])

    h_ref[...] = x2                                  # carry to the next layer step

    # ---- last layer: fused visn MLP + classification head, lane-dense logits ----
    @pl.when(l == num_layers - 1)
    def _():
        lang_bf = x2.astype(jnp.bfloat16)
        # TODO(synk): nn.Dropout(0.3) is identity at inference time; not applied.
        if bertonly:
            logits = jnp.dot(lang_bf, hw_ref[...],
                             preferred_element_type=jnp.float32) + hb_ref[...]
        else:
            # visn_model: 2-layer MLP feature encoder -> (1, H)
            vh = jnp.dot(visn_ref[0], vw1_ref[...],
                         preferred_element_type=jnp.float32) + vb1_ref[...]
            vh = jnp.maximum(vh, 0.0)
            visn_out = jnp.dot(vh.astype(jnp.bfloat16), vw2_ref[...],
                               preferred_element_type=jnp.float32) + vb2_ref[...]
            # cat(lang, repeat(visn)) @ W(2H,2) == lang @ W[:H] + visn @ W[H:]  (+ bias),
            # with W zero-padded to 128 output lanes for unmasked (lane-dense) stores.
            logits = (jnp.dot(lang_bf, hwl_ref[...], preferred_element_type=jnp.float32)
                      + jnp.dot(visn_out.astype(jnp.bfloat16), hwv_ref[...],
                                preferred_element_type=jnp.float32)
                      + hb_ref[...])
        o_ref[0] = logits.astype(o_ref.dtype)


# ---------------------------------------------------------------------------
# JointModel.forward equivalent (whole forward = one pallas_call + XLA glue)
# ---------------------------------------------------------------------------
def joint_model_forward(params, lang_input, visn_input=None, num_heads=2, bertonly=False):
    input_ids, attention_mask = lang_input
    B, S = input_ids.shape
    token_type_ids = jnp.zeros_like(input_ids)

    # Embedding gathers (glue, plain JAX). Embedding LN is recomputed in f32 inside the
    # kernel's layer-0 step, so the (B,S,H) activation is streamed to the kernel in bf16.
    x = (params["word_emb"][input_ids]
         + params["pos_emb"][jnp.arange(S)][None, :, :]
         + params["type_emb"][token_type_ids]).astype(jnp.bfloat16)
    H = x.shape[-1]
    assert H % num_heads == 0
    L = params["wqkv"].shape[0]
    hd = H // num_heads

    # HF BERT extended attention mask: (1 - mask) * -10000.0, additive, f32.
    mask_bias = ((1.0 - attention_mask.astype(jnp.float32)) * -10000.0)[:, None, :]

    def const(shape):
        return pl.BlockSpec(shape, lambda b, l: (0,) * len(shape))

    def per_layer(stacked_shape):
        nd = len(stacked_shape)
        return pl.BlockSpec((1,) + tuple(stacked_shape[1:]),
                            lambda b, l: (l,) + (0,) * (nd - 1))

    in_specs = [
        pl.BlockSpec((1, S, H), lambda b, l: (b, 0, 0)),     # x (bf16)
        pl.BlockSpec((1, 1, S), lambda b, l: (b, 0, 0)),     # additive mask bias (f32)
        const((1, H)), const((1, H)),                        # embedding LN gamma / beta
        per_layer(params["wqkv"].shape), per_layer(params["bqkv"].shape),
        per_layer(params["wo"].shape), per_layer(params["bo"].shape),
        per_layer(params["ln1_g"].shape), per_layer(params["ln1_b"].shape),
        per_layer(params["w1"].shape), per_layer(params["b1"].shape),
        per_layer(params["w2"].shape), per_layer(params["b2"].shape),
        per_layer(params["ln2_g"].shape), per_layer(params["ln2_b"].shape),
    ]
    args = [x, mask_bias, params["emb_ln_g"], params["emb_ln_b"],
            params["wqkv"], params["bqkv"], params["wo"], params["bo"],
            params["ln1_g"], params["ln1_b"], params["w1"], params["b1"],
            params["w2"], params["b2"], params["ln2_g"], params["ln2_b"]]

    if bertonly:
        in_specs += [const((H, 128)), const((1, 128))]
        args += [params["head_bertonly_w_pad"], params["head_bertonly_b_pad"]]
    else:
        (visn_feats,) = visn_input
        Fv = visn_feats.shape[-1]
        vf = visn_feats.reshape(B, 1, Fv).astype(jnp.bfloat16)
        in_specs += [
            pl.BlockSpec((1, 1, Fv), lambda b, l: (b, 0, 0)),    # visn feats
            const((Fv, H)), const((1, H)),                       # visn MLP layer 1
            const((H, H)), const((1, H)),                        # visn MLP layer 2
            const((H, 128)), const((H, 128)), const((1, 128)),   # joint head (lane padded)
        ]
        args += [vf, params["visn_w1"], params["visn_b1"],
                 params["visn_w2"], params["visn_b2"],
                 params["head_wl_pad"], params["head_wv_pad"], params["head_b_pad"]]

    kernel = functools.partial(fused_joint_kernel, num_heads, L, bertonly)
    out_padded = pl.pallas_call(
        kernel,
        out_shape=jax.ShapeDtypeStruct((B, S, 128), jnp.float32),   # lane-dense logits slab
        grid=(B, L),                                                # batch outer, layer inner
        in_specs=in_specs,
        out_specs=pl.BlockSpec((1, S, 128), lambda b, l: (b, 0, 0)),
        scratch_shapes=[
            pltpu.VMEM((S, H), jnp.float32),                    # residual-stream carry
            pltpu.VMEM((S, 3 * H), jnp.bfloat16),               # fused QKV staging
            pltpu.VMEM((3 * num_heads, S, hd), jnp.bfloat16),   # per-head q/k/v
            pltpu.VMEM((S, H), jnp.bfloat16),                   # head-major context slab
        ],
        compiler_params=pltpu.CompilerParams(
            dimension_semantics=("parallel", "arbitrary"),
            vmem_limit_bytes=48 * 1024 * 1024),
    )(*args)
    return out_padded[:, :, :2]


# ---------------------------------------------------------------------------
# Parameter init (deterministic, synthetic - no checkpoint loading)
# Weights stored bf16 (MXU operands); biases / LN params f32.
# Per-layer weights stacked along a leading L axis for the layer grid dimension.
# ---------------------------------------------------------------------------
def init_params(key, vocab, max_pos, type_vocab, H, ffn_dim, L, num_heads, visn_feat):
    std = 0.02
    hd = H // num_heads
    ks = jax.random.split(key, 14)

    def w(k, shape):
        return jax.random.normal(k, shape, jnp.float32) * std

    # Fused QKV weight (L, H, 3H), column order [q | k | v] (head-major within each third),
    # with the 1/sqrt(hd) softmax scale folded into the Q columns on the host.
    scale = 1.0 / (hd ** 0.5)
    wqkv = jnp.concatenate([w(ks[0], (L, H, H)) * scale,
                            w(ks[1], (L, H, H)),
                            w(ks[2], (L, H, H))], axis=-1).astype(jnp.bfloat16)
    bqkv = jnp.zeros((L, 1, 3 * H), jnp.float32)   # (a nonzero Q bias would also be scaled)

    def pad_lanes(a, width=128):
        return jnp.pad(a, ((0, 0), (0, width - a.shape[-1])))

    params = {
        "word_emb": w(ks[3], (vocab, H)),
        "pos_emb": w(ks[4], (max_pos, H)),
        "type_emb": w(ks[5], (type_vocab, H)),
        "emb_ln_g": jnp.ones((1, H), jnp.float32),
        "emb_ln_b": jnp.zeros((1, H), jnp.float32),
        "wqkv": wqkv,
        "bqkv": bqkv,
        # out-projection stored as (nh*hd, H) = (H, H), rows grouped head-major
        "wo": w(ks[6], (L, H, H)).astype(jnp.bfloat16),
        "bo": jnp.zeros((L, 1, H), jnp.float32),
        "ln1_g": jnp.ones((L, 1, H), jnp.float32),
        "ln1_b": jnp.zeros((L, 1, H), jnp.float32),
        "w1": w(ks[7], (L, H, ffn_dim)).astype(jnp.bfloat16),
        "b1": jnp.zeros((L, 1, ffn_dim), jnp.float32),
        "w2": w(ks[8], (L, ffn_dim, H)).astype(jnp.bfloat16),
        "b2": jnp.zeros((L, 1, H), jnp.float32),
        "ln2_g": jnp.ones((L, 1, H), jnp.float32),
        "ln2_b": jnp.zeros((L, 1, H), jnp.float32),
        # TODO(synk): the real visn_model architecture is not given in the snippet; a
        #             2-layer MLP feature encoder stands in for it.
        "visn_w1": w(ks[9], (visn_feat, H)).astype(jnp.bfloat16),
        "visn_b1": jnp.zeros((1, H), jnp.float32),
        "visn_w2": w(ks[10], (H, H)).astype(jnp.bfloat16),
        "visn_b2": jnp.zeros((1, H), jnp.float32),
        # joint head Linear(2H, 2) split into lang/visn halves; zero-padded to 128 output
        # lanes so the in-kernel logit store is lane-dense (unmasked vst).
        "head_wl_pad": pad_lanes(w(ks[11], (H, 2))).astype(jnp.bfloat16),
        "head_wv_pad": pad_lanes(w(ks[12], (H, 2))).astype(jnp.bfloat16),
        "head_b_pad": pad_lanes(jnp.zeros((1, 2), jnp.float32)),
        # bert-only head Linear(H, 2)
        "head_bertonly_w_pad": pad_lanes(w(ks[13], (H, 2))).astype(jnp.bfloat16),
        "head_bertonly_b_pad": pad_lanes(jnp.zeros((1, 2), jnp.float32)),
    }
    return params


if __name__ == "__main__":
    B, S, H, FFN, NUM_HEADS, L = 2, 8, 32, 64, 2, 2
    VOCAB, MAX_POS, TYPE_VOCAB, VISN_FEAT = 100, 64, 2, 48

    params = init_params(jax.random.PRNGKey(0), VOCAB, MAX_POS, TYPE_VOCAB,
                         H, FFN, L, NUM_HEADS, VISN_FEAT)

    k_ids, k_visn = jax.random.split(jax.random.PRNGKey(0))
    input_ids = jax.random.randint(k_ids, (B, S), 0, VOCAB, dtype=jnp.int32)
    attention_mask = jnp.concatenate(
        [jnp.ones((B, S - 2), jnp.int32), jnp.zeros((B, 2), jnp.int32)], axis=1)
    visn_feats = jax.random.normal(k_visn, (B, VISN_FEAT), jnp.float32)

    out = joint_model_forward(params, (input_ids, attention_mask), (visn_feats,),
                              num_heads=NUM_HEADS, bertonly=False)
    out = jax.block_until_ready(out)
    assert out.shape == (B, S, 2) and out.dtype == jnp.float32
    assert bool(jnp.all(jnp.isfinite(out)))

    out_bo = joint_model_forward(params, (input_ids, attention_mask), (visn_feats,),
                                 num_heads=NUM_HEADS, bertonly=True)
    out_bo = jax.block_until_ready(out_bo)
    assert out_bo.shape == (B, S, 2)
    assert bool(jnp.all(jnp.isfinite(out_bo)))

    print("KERNEL_OK")
</pallas_src>

<mosaic_0001>
module attributes {stable_mosaic.version = 11 : i64} {
  func.func @fused_joint_kernel(%arg0: i32, %arg1: i32, %arg2: memref<1x8x32xbf16, #tpu.memory_space<vmem>>, %arg3: memref<1x1x8xf32, #tpu.memory_space<vmem>>, %arg4: memref<1x32xf32, #tpu.memory_space<vmem>>, %arg5: memref<1x32xf32, #tpu.memory_space<vmem>>, %arg6: memref<1x32x96xbf16, #tpu.memory_space<vmem>>, %arg7: memref<1x1x96xf32, #tpu.memory_space<vmem>>, %arg8: memref<1x32x32xbf16, #tpu.memory_space<vmem>>, %arg9: memref<1x1x32xf32, #tpu.memory_space<vmem>>, %arg10: memref<1x1x32xf32, #tpu.memory_space<vmem>>, %arg11: memref<1x1x32xf32, #tpu.memory_space<vmem>>, %arg12: memref<1x32x64xbf16, #tpu.memory_space<vmem>>, %arg13: memref<1x1x64xf32, #tpu.memory_space<vmem>>, %arg14: memref<1x64x32xbf16, #tpu.memory_space<vmem>>, %arg15: memref<1x1x32xf32, #tpu.memory_space<vmem>>, %arg16: memref<1x1x32xf32, #tpu.memory_space<vmem>>, %arg17: memref<1x1x32xf32, #tpu.memory_space<vmem>>, %arg18: memref<1x1x48xbf16, #tpu.memory_space<vmem>>, %arg19: memref<48x32xbf16, #tpu.memory_space<vmem>>, %arg20: memref<1x32xf32, #tpu.memory_space<vmem>>, %arg21: memref<32x32xbf16, #tpu.memory_space<vmem>>, %arg22: memref<1x32xf32, #tpu.memory_space<vmem>>, %arg23: memref<32x128xbf16, #tpu.memory_space<vmem>>, %arg24: memref<32x128xbf16, #tpu.memory_space<vmem>>, %arg25: memref<1x128xf32, #tpu.memory_space<vmem>>, %arg26: memref<1x8x128xf32, #tpu.memory_space<vmem>>, %arg27: memref<8x32xf32, #tpu.memory_space<vmem>>, %arg28: memref<8x96xbf16, #tpu.memory_space<vmem>>, %arg29: memref<6x8x16xbf16, #tpu.memory_space<vmem>>, %arg30: memref<8x32xbf16, #tpu.memory_space<vmem>>) attributes {dimension_semantics = [#tpu.dimension_semantics<parallel>, #tpu.dimension_semantics<arbitrary>], iteration_bounds = array<i64: 2, 2>, scalar_prefetch = 0 : i64, scratch_operands = 4 : i64, tpu.core_type = #tpu.core_type<tc>, window_params = [{transform_indices = @transform_0, window_bounds = array<i64: 1, 8, 32>}, {transform_indices = @transform_1, window_bounds = array<i64: 1, 1, 8>}, {pipeline_mode = #tpu.pipeline_mode<synchronous>, transform_indices = @transform_2, window_bounds = array<i64: 1, 32>}, {pipeline_mode = #tpu.pipeline_mode<synchronous>, transform_indices = @transform_3, window_bounds = array<i64: 1, 32>}, {transform_indices = @transform_4, window_bounds = array<i64: 1, 32, 96>}, {transform_indices = @transform_5, window_bounds = array<i64: 1, 1, 96>}, {transform_indices = @transform_6, window_bounds = array<i64: 1, 32, 32>}, {transform_indices = @transform_7, window_bounds = array<i64: 1, 1, 32>}, {transform_indices = @transform_8, window_bounds = array<i64: 1, 1, 32>}, {transform_indices = @transform_9, window_bounds = array<i64: 1, 1, 32>}, {transform_indices = @transform_10, window_bounds = array<i64: 1, 32, 64>}, {transform_indices = @transform_11, window_bounds = array<i64: 1, 1, 64>}, {transform_indices = @transform_12, window_bounds = array<i64: 1, 64, 32>}, {transform_indices = @transform_13, window_bounds = array<i64: 1, 1, 32>}, {transform_indices = @transform_14, window_bounds = array<i64: 1, 1, 32>}, {transform_indices = @transform_15, window_bounds = array<i64: 1, 1, 32>}, {transform_indices = @transform_16, window_bounds = array<i64: 1, 1, 48>}, {pipeline_mode = #tpu.pipeline_mode<synchronous>, transform_indices = @transform_17, window_bounds = array<i64: 48, 32>}, {pipeline_mode = #tpu.pipeline_mode<synchronous>, transform_indices = @transform_18, window_bounds = array<i64: 1, 32>}, {pipeline_mode = #tpu.pipeline_mode<synchronous>, transform_indices = @transform_19, window_bounds = array<i64: 32, 32>}, {pipeline_mode = #tpu.pipeline_mode<synchronous>, transform_indices = @transform_20, window_bounds = array<i64: 1, 32>}, {pipeline_mode = #tpu.pipeline_mode<synchronous>, transform_indices = @transform_21, window_bounds = array<i64: 32, 128>}, {pipeline_mode = #tpu.pipeline_mode<synchronous>, transform_indices = @transform_22, window_bounds = array<i64: 32, 128>}, {pipeline_mode = #tpu.pipeline_mode<synchronous>, transform_indices = @transform_23, window_bounds = array<i64: 1, 128>}, {transform_indices = @transform_24, window_bounds = array<i64: 1, 8, 128>}]} {
    %c0_i32 = arith.constant 0 : i32
    %0 = arith.cmpi eq, %arg1, %c0_i32 : i32
    %1 = arith.extui %0 : i1 to i32
    %c0_i32_0 = arith.constant 0 : i32
    %2 = arith.cmpi ne, %1, %c0_i32_0 : i32
    scf.if %2 {
      %c0_102 = arith.constant 0 : index
      %c0_103 = arith.constant 0 : index
      %c0_104 = arith.constant 0 : index
      %162 = vector.load %arg2[%c0_102, %c0_103, %c0_104] : memref<1x8x32xbf16, #tpu.memory_space<vmem>>, vector<1x8x32xbf16>
      %163 = vector.shape_cast %162 : vector<1x8x32xbf16> to vector<8x32xbf16>
      %164 = arith.extf %163 : vector<8x32xbf16> to vector<8x32xf32>
      %c0_105 = arith.constant 0 : index
      %c0_106 = arith.constant 0 : index
      %165 = vector.load %arg4[%c0_105, %c0_106] : memref<1x32xf32, #tpu.memory_space<vmem>>, vector<1x32xf32>
      %c0_107 = arith.constant 0 : index
      %c0_108 = arith.constant 0 : index
      %166 = vector.load %arg5[%c0_107, %c0_108] : memref<1x32xf32, #tpu.memory_space<vmem>>, vector<1x32xf32>
      %cst_109 = arith.constant dense<0.000000e+00> : vector<8xf32>
      %167 = vector.multi_reduction <add>, %164, %cst_109 [1] : vector<8x32xf32> to vector<8xf32>
      %168 = vector.shape_cast %167 : vector<8xf32> to vector<8x1xf32>
      %cst_110 = arith.constant 3.200000e+01 : f32
      %169 = vector.broadcast %cst_110 : f32 to vector<8x1xf32>
      %170 = arith.divf %168, %169 : vector<8x1xf32>
      %171 = vector.broadcast %170 : vector<8x1xf32> to vector<8x32xf32>
      %172 = arith.subf %164, %171 : vector<8x32xf32>
      %173 = arith.mulf %172, %172 : vector<8x32xf32>
      %cst_111 = arith.constant dense<0.000000e+00> : vector<8xf32>
      %174 = vector.multi_reduction <add>, %173, %cst_111 [1] : vector<8x32xf32> to vector<8xf32>
      %175 = vector.shape_cast %174 : vector<8xf32> to vector<8x1xf32>
      %cst_112 = arith.constant 3.200000e+01 : f32
      %176 = vector.broadcast %cst_112 : f32 to vector<8x1xf32>
      %177 = arith.divf %175, %176 : vector<8x1xf32>
      %178 = vector.broadcast %170 : vector<8x1xf32> to vector<8x32xf32>
      %179 = arith.subf %164, %178 : vector<8x32xf32>
      %cst_113 = arith.constant 9.99999996E-13 : f32
      %180 = vector.broadcast %cst_113 : f32 to vector<8x1xf32>
      %181 = arith.addf %177, %180 : vector<8x1xf32>
      %182 = math.rsqrt %181 : vector<8x1xf32>
      %183 = vector.broadcast %182 : vector<8x1xf32> to vector<8x32xf32>
      %184 = arith.mulf %179, %183 : vector<8x32xf32>
      %185 = vector.broadcast %165 : vector<1x32xf32> to vector<8x32xf32>
      %186 = arith.mulf %184, %185 : vector<8x32xf32>
      %187 = vector.broadcast %166 : vector<1x32xf32> to vector<8x32xf32>
      %188 = arith.addf %186, %187 : vector<8x32xf32>
      %c0_114 = arith.constant 0 : index
      %c0_115 = arith.constant 0 : index
      %189 = vector.load %arg27[%c0_114, %c0_115] : memref<8x32xf32, #tpu.memory_space<vmem>>, vector<8x32xf32>
      tpu.vector_store %arg27[%c0_114, %c0_115], %188 {strides = array<i32>} : memref<8x32xf32, #tpu.memory_space<vmem>>, vector<8x32xf32>,
    } else {
    }
    %c0 = arith.constant 0 : index
    %c0_1 = arith.constant 0 : index
    %3 = vector.load %arg27[%c0, %c0_1] : memref<8x32xf32, #tpu.memory_space<vmem>>, vector<8x32xf32>
    %4 = arith.truncf %3 : vector<8x32xf32> to vector<8x32xbf16>
    %c0_2 = arith.constant 0 : index
    %c0_3 = arith.constant 0 : index
    %c0_4 = arith.constant 0 : index
    %5 = vector.load %arg6[%c0_2, %c0_3, %c0_4] : memref<1x32x96xbf16, #tpu.memory_space<vmem>>, vector<1x32x96xbf16>
    %6 = vector.shape_cast %5 : vector<1x32x96xbf16> to vector<32x96xbf16>
    %cst = arith.constant dense<0.000000e+00> : vector<8x96xf32>
    %7 = tpu.matmul %4, %6, %cst {dimension_numbers = #tpu.dot_dimension_numbers<[1], [0], [0], [1], [0, 0, 1, 1], [], []>} : vector<8x32xbf16>, vector<32x96xbf16>, vector<8x96xf32> -> vector<8x96xf32>
    %c0_5 = arith.constant 0 : index
    %c0_6 = arith.constant 0 : index
    %c0_7 = arith.constant 0 : index
    %8 = vector.load %arg7[%c0_5, %c0_6, %c0_7] : memref<1x1x96xf32, #tpu.memory_space<vmem>>, vector<1x1x96xf32>
    %9 = vector.shape_cast %8 : vector<1x1x96xf32> to vector<1x96xf32>
    %10 = vector.broadcast %9 : vector<1x96xf32> to vector<8x96xf32>
    %11 = arith.addf %7, %10 : vector<8x96xf32>
    %12 = arith.truncf %11 : vector<8x96xf32> to vector<8x96xbf16>
    %c0_8 = arith.constant 0 : index
    %c0_9 = arith.constant 0 : index
    %13 = vector.load %arg28[%c0_8, %c0_9] : memref<8x96xbf16, #tpu.memory_space<vmem>>, vector<8x96xbf16>
    tpu.vector_store %arg28[%c0_8, %c0_9], %12 {strides = array<i32>} : memref<8x96xbf16, #tpu.memory_space<vmem>>, vector<8x96xbf16>,
    %c0_10 = arith.constant 0 : index
    %c0_11 = arith.constant 0 : index
    %14 = vector.load %arg28[%c0_10, %c0_11] : memref<8x96xbf16, #tpu.memory_space<vmem>>, vector<8x16xbf16>
    %c0_12 = arith.constant 0 : index
    %c0_13 = arith.constant 0 : index
    %c0_14 = arith.constant 0 : index
    %15 = vector.load %arg29[%c0_12, %c0_13, %c0_14] : memref<6x8x16xbf16, #tpu.memory_space<vmem>>, vector<1x8x16xbf16>
    %16 = vector.shape_cast %15 : vector<1x8x16xbf16> to vector<8x16xbf16>
    %17 = vector.shape_cast %14 : vector<8x16xbf16> to vector<1x8x16xbf16>
    tpu.vector_store %arg29[%c0_12, %c0_13, %c0_14], %17 {strides = array<i32>} : memref<6x8x16xbf16, #tpu.memory_space<vmem>>, vector<1x8x16xbf16>,
    %c0_15 = arith.constant 0 : index
    %c16 = arith.constant 16 : index
    %18 = vector.load %arg28[%c0_15, %c16] : memref<8x96xbf16, #tpu.memory_space<vmem>>, vector<8x16xbf16>
    %c1 = arith.constant 1 : index
    %c0_16 = arith.constant 0 : index
    %c0_17 = arith.constant 0 : index
    %19 = vector.load %arg29[%c1, %c0_16, %c0_17] : memref<6x8x16xbf16, #tpu.memory_space<vmem>>, vector<1x8x16xbf16>
    %20 = vector.shape_cast %19 : vector<1x8x16xbf16> to vector<8x16xbf16>
    %21 = vector.shape_cast %18 : vector<8x16xbf16> to vector<1x8x16xbf16>
    tpu.vector_store %arg29[%c1, %c0_16, %c0_17], %21 {strides = array<i32>} : memref<6x8x16xbf16, #tpu.memory_space<vmem>>, vector<1x8x16xbf16>,
    %c0_18 = arith.constant 0 : index
    %c32 = arith.constant 32 : index
    %22 = vector.load %arg28[%c0_18, %c32] : memref<8x96xbf16, #tpu.memory_space<vmem>>, vector<8x16xbf16>
    %c2 = arith.constant 2 : index
    %c0_19 = arith.constant 0 : index
    %c0_20 = arith.constant 0 : index
    %23 = vector.load %arg29[%c2, %c0_19, %c0_20] : memref<6x8x16xbf16, #tpu.memory_space<vmem>>, vector<1x8x16xbf16>
    %24 = vector.shape_cast %23 : vector<1x8x16xbf16> to vector<8x16xbf16>
    %25 = vector.shape_cast %22 : vector<8x16xbf16> to vector<1x8x16xbf16>
    tpu.vector_store %arg29[%c2, %c0_19, %c0_20], %25 {strides = array<i32>} : memref<6x8x16xbf16, #tpu.memory_space<vmem>>, vector<1x8x16xbf16>,
    %c0_21 = arith.constant 0 : index
    %c48 = arith.constant 48 : index
    %26 = vector.load %arg28[%c0_21, %c48] : memref<8x96xbf16, #tpu.memory_space<vmem>>, vector<8x16xbf16>
    %c3 = arith.constant 3 : index
    %c0_22 = arith.constant 0 : index
    %c0_23 = arith.constant 0 : index
    %27 = vector.load %arg29[%c3, %c0_22, %c0_23] : memref<6x8x16xbf16, #tpu.memory_space<vmem>>, vector<1x8x16xbf16>
    %28 = vector.shape_cast %27 : vector<1x8x16xbf16> to vector<8x16xbf16>
    %29 = vector.shape_cast %26 : vector<8x16xbf16> to vector<1x8x16xbf16>
    tpu.vector_store %arg29[%c3, %c0_22, %c0_23], %29 {strides = array<i32>} : memref<6x8x16xbf16, #tpu.memory_space<vmem>>, vector<1x8x16xbf16>,
    %c0_24 = arith.constant 0 : index
    %c64 = arith.constant 64 : index
    %30 = vector.load %arg28[%c0_24, %c64] : memref<8x96xbf16, #tpu.memory_space<vmem>>, vector<8x16xbf16>
    %c4 = arith.constant 4 : index
    %c0_25 = arith.constant 0 : index
    %c0_26 = arith.constant 0 : index
    %31 = vector.load %arg29[%c4, %c0_25, %c0_26] : memref<6x8x16xbf16, #tpu.memory_space<vmem>>, vector<1x8x16xbf16>
    %32 = vector.shape_cast %31 : vector<1x8x16xbf16> to vector<8x16xbf16>
    %33 = vector.shape_cast %30 : vector<8x16xbf16> to vector<1x8x16xbf16>
    tpu.vector_store %arg29[%c4, %c0_25, %c0_26], %33 {strides = array<i32>} : memref<6x8x16xbf16, #tpu.memory_space<vmem>>, vector<1x8x16xbf16>,
    %c0_27 = arith.constant 0 : index
    %c80 = arith.constant 80 : index
    %34 = vector.load %arg28[%c0_27, %c80] : memref<8x96xbf16, #tpu.memory_space<vmem>>, vector<8x16xbf16>
    %c5 = arith.constant 5 : index
    %c0_28 = arith.constant 0 : index
    %c0_29 = arith.constant 0 : index
    %35 = vector.load %arg29[%c5, %c0_28, %c0_29] : memref<6x8x16xbf16, #tpu.memory_space<vmem>>, vector<1x8x16xbf16>
    %36 = vector.shape_cast %35 : vector<1x8x16xbf16> to vector<8x16xbf16>
    %37 = vector.shape_cast %34 : vector<8x16xbf16> to vector<1x8x16xbf16>
    tpu.vector_store %arg29[%c5, %c0_28, %c0_29], %37 {strides = array<i32>} : memref<6x8x16xbf16, #tpu.memory_space<vmem>>, vector<1x8x16xbf16>,
    %c0_30 = arith.constant 0 : index
    %c0_31 = arith.constant 0 : index
    %c0_32 = arith.constant 0 : index
    %38 = vector.load %arg29[%c0_30, %c0_31, %c0_32] : memref<6x8x16xbf16, #tpu.memory_space<vmem>>, vector<2x8x16xbf16>
    %c2_33 = arith.constant 2 : index
    %c0_34 = arith.constant 0 : index
    %c0_35 = arith.constant 0 : index
    %39 = vector.load %arg29[%c2_33, %c0_34, %c0_35] : memref<6x8x16xbf16, #tpu.memory_space<vmem>>, vector<2x8x16xbf16>
    %c4_36 = arith.constant 4 : index
    %c0_37 = arith.constant 0 : index
    %c0_38 = arith.constant 0 : index
    %40 = vector.load %arg29[%c4_36, %c0_37, %c0_38] : memref<6x8x16xbf16, #tpu.memory_space<vmem>>, vector<2x8x16xbf16>
    "tpu.trace_start"() <{level = 10 : i32, message = "nqd,nkd->nqk"}> : () -> ()
    %cst_39 = arith.constant dense<0.000000e+00> : vector<2x8x8xf32>
    %41 = tpu.matmul %38, %39, %cst_39 {dimension_numbers = #tpu.dot_dimension_numbers<[2], [2], [1], [1], [0, 0, 0, 1, 1, 1], [0], [0]>} : vector<2x8x16xbf16>, vector<2x8x16xbf16>, vector<2x8x8xf32> -> vector<2x8x8xf32>
    "tpu.trace_stop"() : () -> ()
    %c0_40 = arith.constant 0 : index
    %c0_41 = arith.constant 0 : index
    %c0_42 = arith.constant 0 : index
    %42 = vector.load %arg3[%c0_40, %c0_41, %c0_42] : memref<1x1x8xf32, #tpu.memory_space<vmem>>, vector<1x1x8xf32>
    %43 = vector.shape_cast %42 : vector<1x1x8xf32> to vector<1x8xf32>
    %44 = vector.shape_cast %43 : vector<1x8xf32> to vector<1x1x8xf32>
    %45 = vector.broadcast %44 : vector<1x1x8xf32> to vector<2x8x8xf32>
    %46 = arith.addf %41, %45 : vector<2x8x8xf32>
    %cst_43 = arith.constant dense<0xFF800000> : vector<2x8xf32>
    %47 = vector.multi_reduction <maximumf>, %46, %cst_43 [2] : vector<2x8x8xf32> to vector<2x8xf32>
    %48 = vector.shape_cast %47 : vector<2x8xf32> to vector<2x8x1xf32>
    %49 = vector.broadcast %48 : vector<2x8x1xf32> to vector<2x8x8xf32>
    %50 = arith.subf %46, %49 : vector<2x8x8xf32>
    %51 = math.exp %50 : vector<2x8x8xf32>
    %cst_44 = arith.constant dense<0.000000e+00> : vector<2x8xf32>
    %52 = vector.multi_reduction <add>, %51, %cst_44 [2] : vector<2x8x8xf32> to vector<2x8xf32>
    %53 = vector.shape_cast %52 : vector<2x8xf32> to vector<2x8x1xf32>
    %54 = tpu.reciprocal %53 {approx = true} : vector<2x8x1xf32> -> vector<2x8x1xf32>
    %55 = vector.broadcast %54 : vector<2x8x1xf32> to vector<2x8x8xf32>
    %56 = arith.mulf %51, %55 : vector<2x8x8xf32>
    %57 = arith.truncf %56 : vector<2x8x8xf32> to vector<2x8x8xbf16>
    "tpu.trace_start"() <{level = 10 : i32, message = "nqk,nkd->nqd"}> : () -> ()
    %cst_45 = arith.constant dense<0.000000e+00> : vector<2x8x16xf32>
    %58 = tpu.matmul %57, %40, %cst_45 {dimension_numbers = #tpu.dot_dimension_numbers<[2], [1], [1], [2], [0, 0, 0, 1, 1, 2], [0], [0]>} : vector<2x8x8xbf16>, vector<2x8x16xbf16>, vector<2x8x16xf32> -> vector<2x8x16xf32>
    "tpu.trace_stop"() : () -> ()
    %59 = vector.extract_strided_slice %58 {offsets = [0, 0, 0], sizes = [1, 8, 16], strides = [1, 1, 1]} : vector<2x8x16xf32> to vector<1x8x16xf32>
    %60 = vector.shape_cast %59 : vector<1x8x16xf32> to vector<8x16xf32>
    %61 = arith.truncf %60 : vector<8x16xf32> to vector<8x16xbf16>
    %c0_46 = arith.constant 0 : index
    %c0_47 = arith.constant 0 : index
    %62 = vector.load %arg30[%c0_46, %c0_47] : memref<8x32xbf16, #tpu.memory_space<vmem>>, vector<8x16xbf16>
    tpu.vector_store %arg30[%c0_46, %c0_47], %61 {strides = array<i32>} : memref<8x32xbf16, #tpu.memory_space<vmem>>, vector<8x16xbf16>,
    %63 = vector.extract_strided_slice %58 {offsets = [1, 0, 0], sizes = [1, 8, 16], strides = [1, 1, 1]} : vector<2x8x16xf32> to vector<1x8x16xf32>
    %64 = vector.shape_cast %63 : vector<1x8x16xf32> to vector<8x16xf32>
    %65 = arith.truncf %64 : vector<8x16xf32> to vector<8x16xbf16>
    %c0_48 = arith.constant 0 : index
    %c16_49 = arith.constant 16 : index
    %66 = vector.load %arg30[%c0_48, %c16_49] : memref<8x32xbf16, #tpu.memory_space<vmem>>, vector<8x16xbf16>
    tpu.vector_store %arg30[%c0_48, %c16_49], %65 {strides = array<i32>} : memref<8x32xbf16, #tpu.memory_space<vmem>>, vector<8x16xbf16>,
    %c0_50 = arith.constant 0 : index
    %c0_51 = arith.constant 0 : index
    %67 = vector.load %arg30[%c0_50, %c0_51] : memref<8x32xbf16, #tpu.memory_space<vmem>>, vector<8x32xbf16>
    %c0_52 = arith.constant 0 : index
    %c0_53 = arith.constant 0 : index
    %c0_54 = arith.constant 0 : index
    %68 = vector.load %arg8[%c0_52, %c0_53, %c0_54] : memref<1x32x32xbf16, #tpu.memory_space<vmem>>, vector<1x32x32xbf16>
    %69 = vector.shape_cast %68 : vector<1x32x32xbf16> to vector<32x32xbf16>
    %cst_55 = arith.constant dense<0.000000e+00> : vector<8x32xf32>
    %70 = tpu.matmul %67, %69, %cst_55 {dimension_numbers = #tpu.dot_dimension_numbers<[1], [0], [0], [1], [0, 0, 1, 1], [], []>} : vector<8x32xbf16>, vector<32x32xbf16>, vector<8x32xf32> -> vector<8x32xf32>
    %c0_56 = arith.constant 0 : index
    %c0_57 = arith.constant 0 : index
    %c0_58 = arith.constant 0 : index
    %71 = vector.load %arg9[%c0_56, %c0_57, %c0_58] : memref<1x1x32xf32, #tpu.memory_space<vmem>>, vector<1x1x32xf32>
    %72 = vector.shape_cast %71 : vector<1x1x32xf32> to vector<1x32xf32>
    %73 = vector.broadcast %72 : vector<1x32xf32> to vector<8x32xf32>
    %74 = arith.addf %70, %73 : vector<8x32xf32>
    %75 = arith.addf %3, %74 : vector<8x32xf32>
    %c0_59 = arith.constant 0 : index
    %c0_60 = arith.constant 0 : index
    %c0_61 = arith.constant 0 : index
    %76 = vector.load %arg10[%c0_59, %c0_60, %c0_61] : memref<1x1x32xf32, #tpu.memory_space<vmem>>, vector<1x1x32xf32>
    %77 = vector.shape_cast %76 : vector<1x1x32xf32> to vector<1x32xf32>
    %c0_62 = arith.constant 0 : index
    %c0_63 = arith.constant 0 : index
    %c0_64 = arith.constant 0 : index
    %78 = vector.load %arg11[%c0_62, %c0_63, %c0_64] : memref<1x1x32xf32, #tpu.memory_space<vmem>>, vector<1x1x32xf32>
    %79 = vector.shape_cast %78 : vector<1x1x32xf32> to vector<1x32xf32>
    %cst_65 = arith.constant dense<0.000000e+00> : vector<8xf32>
    %80 = vector.multi_reduction <add>, %75, %cst_65 [1] : vector<8x32xf32> to vector<8xf32>
    %81 = vector.shape_cast %80 : vector<8xf32> to vector<8x1xf32>
    %cst_66 = arith.constant 3.200000e+01 : f32
    %82 = vector.broadcast %cst_66 : f32 to vector<8x1xf32>
    %83 = arith.divf %81, %82 : vector<8x1xf32>
    %84 = vector.broadcast %83 : vector<8x1xf32> to vector<8x32xf32>
    %85 = arith.subf %75, %84 : vector<8x32xf32>
    %86 = arith.mulf %85, %85 : vector<8x32xf32>
    %cst_67 = arith.constant dense<0.000000e+00> : vector<8xf32>
    %87 = vector.multi_reduction <add>, %86, %cst_67 [1] : vector<8x32xf32> to vector<8xf32>
    %88 = vector.shape_cast %87 : vector<8xf32> to vector<8x1xf32>
    %cst_68 = arith.constant 3.200000e+01 : f32
    %89 = vector.broadcast %cst_68 : f32 to vector<8x1xf32>
    %90 = arith.divf %88, %89 : vector<8x1xf32>
    %91 = vector.broadcast %83 : vector<8x1xf32> to vector<8x32xf32>
    %92 = arith.subf %75, %91 : vector<8x32xf32>
    %cst_69 = arith.constant 9.99999996E-13 : f32
    %93 = vector.broadcast %cst_69 : f32 to vector<8x1xf32>
    %94 = arith.addf %90, %93 : vector<8x1xf32>
    %95 = math.rsqrt %94 : vector<8x1xf32>
    %96 = vector.broadcast %95 : vector<8x1xf32> to vector<8x32xf32>
    %97 = arith.mulf %92, %96 : vector<8x32xf32>
    %98 = vector.broadcast %77 : vector<1x32xf32> to vector<8x32xf32>
    %99 = arith.mulf %97, %98 : vector<8x32xf32>
    %100 = vector.broadcast %79 : vector<1x32xf32> to vector<8x32xf32>
    %101 = arith.addf %99, %100 : vector<8x32xf32>
    %102 = arith.truncf %101 : vector<8x32xf32> to vector<8x32xbf16>
    %c0_70 = arith.constant 0 : index
    %c0_71 = arith.constant 0 : index
    %c0_72 = arith.constant 0 : index
    %103 = vector.load %arg12[%c0_70, %c0_71, %c0_72] : memref<1x32x64xbf16, #tpu.memory_space<vmem>>, vector<1x32x64xbf16>
    %104 = vector.shape_cast %103 : vector<1x32x64xbf16> to vector<32x64xbf16>
    %cst_73 = arith.constant dense<0.000000e+00> : vector<8x64xf32>
    %105 = tpu.matmul %102, %104, %cst_73 {dimension_numbers = #tpu.dot_dimension_numbers<[1], [0], [0], [1], [0, 0, 1, 1], [], []>} : vector<8x32xbf16>, vector<32x64xbf16>, vector<8x64xf32> -> vector<8x64xf32>
    %c0_74 = arith.constant 0 : index
    %c0_75 = arith.constant 0 : index
    %c0_76 = arith.constant 0 : index
    %106 = vector.load %arg13[%c0_74, %c0_75, %c0_76] : memref<1x1x64xf32, #tpu.memory_space<vmem>>, vector<1x1x64xf32>
    %107 = vector.shape_cast %106 : vector<1x1x64xf32> to vector<1x64xf32>
    %108 = vector.broadcast %107 : vector<1x64xf32> to vector<8x64xf32>
    %109 = arith.addf %105, %108 : vector<8x64xf32>
    %110 = arith.mulf %109, %109 : vector<8x64xf32>
    %111 = arith.mulf %109, %110 : vector<8x64xf32>
    %cst_77 = arith.constant 4.471500e-02 : f32
    %112 = vector.broadcast %cst_77 : f32 to vector<8x64xf32>
    %113 = arith.mulf %112, %111 : vector<8x64xf32>
    %114 = arith.addf %109, %113 : vector<8x64xf32>
    %cst_78 = arith.constant 0.797884583 : f32
    %115 = vector.broadcast %cst_78 : f32 to vector<8x64xf32>
    %116 = arith.mulf %115, %114 : vector<8x64xf32>
    %117 = math.tanh %116 : vector<8x64xf32>
    %cst_79 = arith.constant 1.000000e+00 : f32
    %118 = vector.broadcast %cst_79 : f32 to vector<8x64xf32>
    %119 = arith.addf %118, %117 : vector<8x64xf32>
    %cst_80 = arith.constant 5.000000e-01 : f32
    %120 = vector.broadcast %cst_80 : f32 to vector<8x64xf32>
    %121 = arith.mulf %120, %119 : vector<8x64xf32>
    %122 = arith.mulf %109, %121 : vector<8x64xf32>
    %123 = arith.truncf %122 : vector<8x64xf32> to vector<8x64xbf16>
    %c0_81 = arith.constant 0 : index
    %c0_82 = arith.constant 0 : index
    %c0_83 = arith.constant 0 : index
    %124 = vector.load %arg14[%c0_81, %c0_82, %c0_83] : memref<1x64x32xbf16, #tpu.memory_space<vmem>>, vector<1x64x32xbf16>
    %125 = vector.shape_cast %124 : vector<1x64x32xbf16> to vector<64x32xbf16>
    %cst_84 = arith.constant dense<0.000000e+00> : vector<8x32xf32>
    %126 = tpu.matmul %123, %125, %cst_84 {dimension_numbers = #tpu.dot_dimension_numbers<[1], [0], [0], [1], [0, 0, 1, 1], [], []>} : vector<8x64xbf16>, vector<64x32xbf16>, vector<8x32xf32> -> vector<8x32xf32>
    %c0_85 = arith.constant 0 : index
    %c0_86 = arith.constant 0 : index
    %c0_87 = arith.constant 0 : index
    %127 = vector.load %arg15[%c0_85, %c0_86, %c0_87] : memref<1x1x32xf32, #tpu.memory_space<vmem>>, vector<1x1x32xf32>
    %128 = vector.shape_cast %127 : vector<1x1x32xf32> to vector<1x32xf32>
    %129 = vector.broadcast %128 : vector<1x32xf32> to vector<8x32xf32>
    %130 = arith.addf %126, %129 : vector<8x32xf32>
    %131 = arith.addf %101, %130 : vector<8x32xf32>
    %c0_88 = arith.constant 0 : index
    %c0_89 = arith.constant 0 : index
    %c0_90 = arith.constant 0 : index
    %132 = vector.load %arg16[%c0_88, %c0_89, %c0_90] : memref<1x1x32xf32, #tpu.memory_space<vmem>>, vector<1x1x32xf32>
    %133 = vector.shape_cast %132 : vector<1x1x32xf32> to vector<1x32xf32>
    %c0_91 = arith.constant 0 : index
    %c0_92 = arith.constant 0 : index
    %c0_93 = arith.constant 0 : index
    %134 = vector.load %arg17[%c0_91, %c0_92, %c0_93] : memref<1x1x32xf32, #tpu.memory_space<vmem>>, vector<1x1x32xf32>
    %135 = vector.shape_cast %134 : vector<1x1x32xf32> to vector<1x32xf32>
    %cst_94 = arith.constant dense<0.000000e+00> : vector<8xf32>
    %136 = vector.multi_reduction <add>, %131, %cst_94 [1] : vector<8x32xf32> to vector<8xf32>
    %137 = vector.shape_cast %136 : vector<8xf32> to vector<8x1xf32>
    %cst_95 = arith.constant 3.200000e+01 : f32
    %138 = vector.broadcast %cst_95 : f32 to vector<8x1xf32>
    %139 = arith.divf %137, %138 : vector<8x1xf32>
    %140 = vector.broadcast %139 : vector<8x1xf32> to vector<8x32xf32>
    %141 = arith.subf %131, %140 : vector<8x32xf32>
    %142 = arith.mulf %141, %141 : vector<8x32xf32>
    %cst_96 = arith.constant dense<0.000000e+00> : vector<8xf32>
    %143 = vector.multi_reduction <add>, %142, %cst_96 [1] : vector<8x32xf32> to vector<8xf32>
    %144 = vector.shape_cast %143 : vector<8xf32> to vector<8x1xf32>
    %cst_97 = arith.constant 3.200000e+01 : f32
    %145 = vector.broadcast %cst_97 : f32 to vector<8x1xf32>
    %146 = arith.divf %144, %145 : vector<8x1xf32>
    %147 = vector.broadcast %139 : vector<8x1xf32> to vector<8x32xf32>
    %148 = arith.subf %131, %147 : vector<8x32xf32>
    %cst_98 = arith.constant 9.99999996E-13 : f32
    %149 = vector.broadcast %cst_98 : f32 to vector<8x1xf32>
    %150 = arith.addf %146, %149 : vector<8x1xf32>
    %151 = math.rsqrt %150 : vector<8x1xf32>
    %152 = vector.broadcast %151 : vector<8x1xf32> to vector<8x32xf32>
    %153 = arith.mulf %148, %152 : vector<8x32xf32>
    %154 = vector.broadcast %133 : vector<1x32xf32> to vector<8x32xf32>
    %155 = arith.mulf %153, %154 : vector<8x32xf32>
    %156 = vector.broadcast %135 : vector<1x32xf32> to vector<8x32xf32>
    %157 = arith.addf %155, %156 : vector<8x32xf32>
    %c0_99 = arith.constant 0 : index
    %c0_100 = arith.constant 0 : index
    %158 = vector.load %arg27[%c0_99, %c0_100] : memref<8x32xf32, #tpu.memory_space<vmem>>, vector<8x32xf32>
    tpu.vector_store %arg27[%c0_99, %c0_100], %157 {strides = array<i32>} : memref<8x32xf32, #tpu.memory_space<vmem>>, vector<8x32xf32>,
    %c1_i32 = arith.constant 1 : i32
    %159 = arith.cmpi eq, %arg1, %c1_i32 : i32
    %160 = arith.extui %159 : i1 to i32
    %c0_i32_101 = arith.constant 0 : i32
    %161 = arith.cmpi ne, %160, %c0_i32_101 : i32
    scf.if %161 {
      %162 = arith.truncf %157 : vector<8x32xf32> to vector<8x32xbf16>
      %c0_102 = arith.constant 0 : index
      %c0_103 = arith.constant 0 : index
      %c0_104 = arith.constant 0 : index
      %163 = vector.load %arg18[%c0_102, %c0_103, %c0_104] : memref<1x1x48xbf16, #tpu.memory_space<vmem>>, vector<1x1x48xbf16>
      %164 = vector.shape_cast %163 : vector<1x1x48xbf16> to vector<1x48xbf16>
      %c0_105 = arith.constant 0 : index
      %c0_106 = arith.constant 0 : index
      %165 = vector.load %arg19[%c0_105, %c0_106] : memref<48x32xbf16, #tpu.memory_space<vmem>>, vector<48x32xbf16>
      %cst_107 = arith.constant dense<0.000000e+00> : vector<1x32xf32>
      %166 = tpu.matmul %164, %165, %cst_107 {dimension_numbers = #tpu.dot_dimension_numbers<[1], [0], [0], [1], [0, 0, 1, 1], [], []>} : vector<1x48xbf16>, vector<48x32xbf16>, vector<1x32xf32> -> vector<1x32xf32>
      %c0_108 = arith.constant 0 : index
      %c0_109 = arith.constant 0 : index
      %167 = vector.load %arg20[%c0_108, %c0_109] : memref<1x32xf32, #tpu.memory_space<vmem>>, vector<1x32xf32>
      %168 = arith.addf %166, %167 : vector<1x32xf32>
      %cst_110 = arith.constant 0.000000e+00 : f32
      %169 = vector.broadcast %cst_110 : f32 to vector<1x32xf32>
      %170 = arith.maximumf %168, %169 : vector<1x32xf32>
      %171 = arith.truncf %170 : vector<1x32xf32> to vector<1x32xbf16>
      %c0_111 = arith.constant 0 : index
      %c0_112 = arith.constant 0 : index
      %172 = vector.load %arg21[%c0_111, %c0_112] : memref<32x32xbf16, #tpu.memory_space<vmem>>, vector<32x32xbf16>
      %cst_113 = arith.constant dense<0.000000e+00> : vector<1x32xf32>
      %173 = tpu.matmul %171, %172, %cst_113 {dimension_numbers = #tpu.dot_dimension_numbers<[1], [0], [0], [1], [0, 0, 1, 1], [], []>} : vector<1x32xbf16>, vector<32x32xbf16>, vector<1x32xf32> -> vector<1x32xf32>
      %c0_114 = arith.constant 0 : index
      %c0_115 = arith.constant 0 : index
      %174 = vector.load %arg22[%c0_114, %c0_115] : memref<1x32xf32, #tpu.memory_space<vmem>>, vector<1x32xf32>
      %175 = arith.addf %173, %174 : vector<1x32xf32>
      %c0_116 = arith.constant 0 : index
      %c0_117 = arith.constant 0 : index
      %176 = vector.load %arg23[%c0_116, %c0_117] : memref<32x128xbf16, #tpu.memory_space<vmem>>, vector<32x128xbf16>
      %cst_118 = arith.constant dense<0.000000e+00> : vector<8x128xf32>
      %177 = tpu.matmul %162, %176, %cst_118 {dimension_numbers = #tpu.dot_dimension_numbers<[1], [0], [0], [1], [0, 0, 1, 1], [], []>} : vector<8x32xbf16>, vector<32x128xbf16>, vector<8x128xf32> -> vector<8x128xf32>
      %178 = arith.truncf %175 : vector<1x32xf32> to vector<1x32xbf16>
      %c0_119 = arith.constant 0 : index
      %c0_120 = arith.constant 0 : index
      %179 = vector.load %arg24[%c0_119, %c0_120] : memref<32x128xbf16, #tpu.memory_space<vmem>>, vector<32x128xbf16>
      %cst_121 = arith.constant dense<0.000000e+00> : vector<1x128xf32>
      %180 = tpu.matmul %178, %179, %cst_121 {dimension_numbers = #tpu.dot_dimension_numbers<[1], [0], [0], [1], [0, 0, 1, 1], [], []>} : vector<1x32xbf16>, vector<32x128xbf16>, vector<1x128xf32> -> vector<1x128xf32>
      %181 = vector.broadcast %180 : vector<1x128xf32> to vector<8x128xf32>
      %182 = arith.addf %177, %181 : vector<8x128xf32>
      %c0_122 = arith.constant 0 : index
      %c0_123 = arith.constant 0 : index
      %183 = vector.load %arg25[%c0_122, %c0_123] : memref<1x128xf32, #tpu.memory_space<vmem>>, vector<1x128xf32>
      %184 = vector.broadcast %183 : vector<1x128xf32> to vector<8x128xf32>
      %185 = arith.addf %182, %184 : vector<8x128xf32>
      %c0_124 = arith.constant 0 : index
      %c0_125 = arith.constant 0 : index
      %c0_126 = arith.constant 0 : index
      %186 = vector.load %arg26[%c0_124, %c0_125, %c0_126] : memref<1x8x128xf32, #tpu.memory_space<vmem>>, vector<1x8x128xf32>
      %187 = vector.shape_cast %186 : vector<1x8x128xf32> to vector<8x128xf32>
      %188 = vector.shape_cast %185 : vector<8x128xf32> to vector<1x8x128xf32>
      tpu.vector_store %arg26[%c0_124, %c0_125, %c0_126], %188 {strides = array<i32>} : memref<1x8x128xf32, #tpu.memory_space<vmem>>, vector<1x8x128xf32>,
    } else {
    }
    return
  }
  func.func @transform_0(%arg0: i32, %arg1: i32) -> (i32, i32, i32) {
    %c0_i32 = arith.constant 0 : i32
    %c0_i32_0 = arith.constant 0 : i32
    %c0_i32_1 = arith.constant 0 : i32
    return %arg0, %c0_i32, %c0_i32_0 : i32, i32, i32
  }
  func.func @transform_1(%arg0: i32, %arg1: i32) -> (i32, i32, i32) {
    %c0_i32 = arith.constant 0 : i32
    %c0_i32_0 = arith.constant 0 : i32
    %c0_i32_1 = arith.constant 0 : i32
    return %arg0, %c0_i32, %c0_i32_0 : i32, i32, i32
  }
  func.func @transform_2(%arg0: i32, %arg1: i32) -> (i32, i32) {
    %c0_i32 = arith.constant 0 : i32
    %c0_i32_0 = arith.constant 0 : i32
    %c0_i32_1 = arith.constant 0 : i32
    return %c0_i32, %c0_i32_0 : i32, i32
  }
  func.func @transform_3(%arg0: i32, %arg1: i32) -> (i32, i32) {
    %c0_i32 = arith.constant 0 : i32
    %c0_i32_0 = arith.constant 0 : i32
    %c0_i32_1 = arith.constant 0 : i32
    return %c0_i32, %c0_i32_0 : i32, i32
  }
  func.func @transform_4(%arg0: i32, %arg1: i32) -> (i32, i32, i32) {
    %c0_i32 = arith.constant 0 : i32
    %c0_i32_0 = arith.constant 0 : i32
    %c0_i32_1 = arith.constant 0 : i32
    return %arg1, %c0_i32, %c0_i32_0 : i32, i32, i32
  }
  func.func @transform_5(%arg0: i32, %arg1: i32) -> (i32, i32, i32) {
    %c0_i32 = arith.constant 0 : i32
    %c0_i32_0 = arith.constant 0 : i32
    %c0_i32_1 = arith.constant 0 : i32
    return %arg1, %c0_i32, %c0_i32_0 : i32, i32, i32
  }
  func.func @transform_6(%arg0: i32, %arg1: i32) -> (i32, i32, i32) {
    %c0_i32 = arith.constant 0 : i32
    %c0_i32_0 = arith.constant 0 : i32
    %c0_i32_1 = arith.constant 0 : i32
    return %arg1, %c0_i32, %c0_i32_0 : i32, i32, i32
  }
  func.func @transform_7(%arg0: i32, %arg1: i32) -> (i32, i32, i32) {
    %c0_i32 = arith.constant 0 : i32
    %c0_i32_0 = arith.constant 0 : i32
    %c0_i32_1 = arith.constant 0 : i32
    return %arg1, %c0_i32, %c0_i32_0 : i32, i32, i32
  }
  func.func @transform_8(%arg0: i32, %arg1: i32) -> (i32, i32, i32) {
    %c0_i32 = arith.constant 0 : i32
    %c0_i32_0 = arith.constant 0 : i32
    %c0_i32_1 = arith.constant 0 : i32
    return %arg1, %c0_i32, %c0_i32_0 : i32, i32, i32
  }
  func.func @transform_9(%arg0: i32, %arg1: i32) -> (i32, i32, i32) {
    %c0_i32 = arith.constant 0 : i32
    %c0_i32_0 = arith.constant 0 : i32
    %c0_i32_1 = arith.constant 0 : i32
    return %arg1, %c0_i32, %c0_i32_0 : i32, i32, i32
  }
  func.func @transform_10(%arg0: i32, %arg1: i32) -> (i32, i32, i32) {
    %c0_i32 = arith.constant 0 : i32
    %c0_i32_0 = arith.constant 0 : i32
    %c0_i32_1 = arith.constant 0 : i32
    return %arg1, %c0_i32, %c0_i32_0 : i32, i32, i32
  }
  func.func @transform_11(%arg0: i32, %arg1: i32) -> (i32, i32, i32) {
    %c0_i32 = arith.constant 0 : i32
    %c0_i32_0 = arith.constant 0 : i32
    %c0_i32_1 = arith.constant 0 : i32
    return %arg1, %c0_i32, %c0_i32_0 : i32, i32, i32
  }
  func.func @transform_12(%arg0: i32, %arg1: i32) -> (i32, i32, i32) {
    %c0_i32 = arith.constant 0 : i32
    %c0_i32_0 = arith.constant 0 : i32
    %c0_i32_1 = arith.constant 0 : i32
    return %arg1, %c0_i32, %c0_i32_0 : i32, i32, i32
  }
  func.func @transform_13(%arg0: i32, %arg1: i32) -> (i32, i32, i32) {
    %c0_i32 = arith.constant 0 : i32
    %c0_i32_0 = arith.constant 0 : i32
    %c0_i32_1 = arith.constant 0 : i32
    return %arg1, %c0_i32, %c0_i32_0 : i32, i32, i32
  }
  func.func @transform_14(%arg0: i32, %arg1: i32) -> (i32, i32, i32) {
    %c0_i32 = arith.constant 0 : i32
    %c0_i32_0 = arith.constant 0 : i32
    %c0_i32_1 = arith.constant 0 : i32
    return %arg1, %c0_i32, %c0_i32_0 : i32, i32, i32
  }
  func.func @transform_15(%arg0: i32, %arg1: i32) -> (i32, i32, i32) {
    %c0_i32 = arith.constant 0 : i32
    %c0_i32_0 = arith.constant 0 : i32
    %c0_i32_1 = arith.constant 0 : i32
    return %arg1, %c0_i32, %c0_i32_0 : i32, i32, i32
  }
  func.func @transform_16(%arg0: i32, %arg1: i32) -> (i32, i32, i32) {
    %c0_i32 = arith.constant 0 : i32
    %c0_i32_0 = arith.constant 0 : i32
    %c0_i32_1 = arith.constant 0 : i32
    return %arg0, %c0_i32, %c0_i32_0 : i32, i32, i32
  }
  func.func @transform_17(%arg0: i32, %arg1: i32) -> (i32, i32) {
    %c0_i32 = arith.constant 0 : i32
    %c0_i32_0 = arith.constant 0 : i32
    %c0_i32_1 = arith.constant 0 : i32
    return %c0_i32, %c0_i32_0 : i32, i32
  }
  func.func @transform_18(%arg0: i32, %arg1: i32) -> (i32, i32) {
    %c0_i32 = arith.constant 0 : i32
    %c0_i32_0 = arith.constant 0 : i32
    %c0_i32_1 = arith.constant 0 : i32
    return %c0_i32, %c0_i32_0 : i32, i32
  }
  func.func @transform_19(%arg0: i32, %arg1: i32) -> (i32, i32) {
    %c0_i32 = arith.constant 0 : i32
    %c0_i32_0 = arith.constant 0 : i32
    %c0_i32_1 = arith.constant 0 : i32
    return %c0_i32, %c0_i32_0 : i32, i32
  }
  func.func @transform_20(%arg0: i32, %arg1: i32) -> (i32, i32) {
    %c0_i32 = arith.constant 0 : i32
    %c0_i32_0 = arith.constant 0 : i32
    %c0_i32_1 = arith.constant 0 : i32
    return %c0_i32, %c0_i32_0 : i32, i32
  }
  func.func @transform_21(%arg0: i32, %arg1: i32) -> (i32, i32) {
    %c0_i32 = arith.constant 0 : i32
    %c0_i32_0 = arith.constant 0 : i32
    %c0_i32_1 = arith.constant 0 : i32
    return %c0_i32, %c0_i32_0 : i32, i32
  }
  func.func @transform_22(%arg0: i32, %arg1: i32) -> (i32, i32) {
    %c0_i32 = arith.constant 0 : i32
    %c0_i32_0 = arith.constant 0 : i32
    %c0_i32_1 = arith.constant 0 : i32
    return %c0_i32, %c0_i32_0 : i32, i32
  }
  func.func @transform_23(%arg0: i32, %arg1: i32) -> (i32, i32) {
    %c0_i32 = arith.constant 0 : i32
    %c0_i32_0 = arith.constant 0 : i32
    %c0_i32_1 = arith.constant 0 : i32
    return %c0_i32, %c0_i32_0 : i32, i32
  }
  func.func @transform_24(%arg0: i32, %arg1: i32) -> (i32, i32, i32) {
    %c0_i32 = arith.constant 0 : i32
    %c0_i32_0 = arith.constant 0 : i32
    %c0_i32_1 = arith.constant 0 : i32
    return %arg0, %c0_i32, %c0_i32_0 : i32, i32, i32
  }
}

</mosaic_0001>

<llo_original>
// kernel: tpu_custom_call.1
$region0: #{tpu_custom_call.1}
  #allocation0 [shape = 'u32[]', space=smem, size = 0x4, offset = 0x4, fixed_abs, tag = 'smem constant byte address 0x4 - core index']
  #allocation1 [shape = 'u32[72,128]{1,0:T(1,128)}', space=vmem, size = 0x9000, scoped, tag = 'internal scratch']
  #allocation2 [shape = 'f32[8,32]{1,0:T(8,128)}', space=vmem, size = 0x1000, scoped, tag = 'scratch operand']
  #allocation3 [shape = 'bf16[8,96]{1,0:T(8,128)(2,1)}', space=vmem, size = 0x800, scoped, tag = 'scratch operand']
  #allocation4 [shape = 'bf16[6,8,16]{2,1,0:T(8,128)(2,1)}', space=vmem, size = 0x3000, scoped, tag = 'scratch operand']
  #allocation5 [shape = 'bf16[8,32]{1,0:T(8,128)(2,1)}', space=vmem, size = 0x800, scoped, tag = 'scratch operand']
  %s0 = inlined_call_operand.vmem [shape: bf16[2,8,32], index: 0, kind: input, shape index: {}]
  %s1 = inlined_call_operand.vmem [shape: f32[2,1,8], index: 1, kind: input, shape index: {}]
  %s2 = inlined_call_operand.vmem [shape: f32[1,32], index: 2, kind: input, shape index: {}]
  %s3 = inlined_call_operand.hbm [shape: f32[1,32], index: 3, kind: input, shape index: {}]
  %s4 = inlined_call_operand.vmem [shape: bf16[2,32,96], index: 4, kind: input, shape index: {}]
  %s5 = inlined_call_operand.hbm [shape: f32[2,1,96], index: 5, kind: input, shape index: {}]
  %s6 = inlined_call_operand.vmem [shape: bf16[2,32,32], index: 6, kind: input, shape index: {}]
  %s7 = inlined_call_operand.hbm [shape: f32[2,1,32], index: 7, kind: input, shape index: {}]
  %s8 = inlined_call_operand.hbm [shape: f32[2,1,32], index: 8, kind: input, shape index: {}]
  %s9 = inlined_call_operand.hbm [shape: f32[2,1,32], index: 9, kind: input, shape index: {}]
  %s10 = inlined_call_operand.vmem [shape: bf16[2,32,64], index: 10, kind: input, shape index: {}]
  %s11 = inlined_call_operand.hbm [shape: f32[2,1,64], index: 11, kind: input, shape index: {}]
  %s12 = inlined_call_operand.vmem [shape: bf16[2,64,32], index: 12, kind: input, shape index: {}]
  %s13 = inlined_call_operand.hbm [shape: f32[2,1,32], index: 13, kind: input, shape index: {}]
  %s14 = inlined_call_operand.hbm [shape: f32[2,1,32], index: 14, kind: input, shape index: {}]
  %s15 = inlined_call_operand.hbm [shape: f32[2,1,32], index: 15, kind: input, shape index: {}]
  %s16 = inlined_call_operand.vmem [shape: bf16[2,1,48], index: 16, kind: input, shape index: {}]
  %s17 = inlined_call_operand.vmem [shape: bf16[48,32], index: 17, kind: input, shape index: {}]
  %s18 = inlined_call_operand.vmem [shape: f32[1,32], index: 18, kind: input, shape index: {}]
  %s19 = inlined_call_operand.hbm [shape: bf16[32,32], index: 19, kind: input, shape index: {}]
  %s20 = inlined_call_operand.vmem [shape: f32[1,32], index: 20, kind: input, shape index: {}]
  %s21 = inlined_call_operand.hbm [shape: bf16[32,128], index: 21, kind: input, shape index: {}]
  %s22 = inlined_call_operand.hbm [shape: bf16[32,128], index: 22, kind: input, shape index: {}]
  %s23 = inlined_call_operand.vmem [shape: f32[1,128], index: 23, kind: input, shape index: {}]
  %s24 = inlined_call_operand.hbm [shape: f32[2,8,128], index: 24, kind: output, shape index: {}]
  %s25 = sld [smem:[#allocation0]]
  $region185: #{tpu_custom_call.1} parent=0
    _
  %s27 = ssub.s32 1, %s25
  %s28 = scalar_select 0, %s27, %s25
  $region1: #{tpu_custom_call.1} parent=0
    #allocation6 [shape = 'u8[512]{0}', space=vmem, size = 0x400, scoped, tag = 'input window, operand 3, single buffered']
    #allocation7 [shape = 's32[2]{0}', space=sflag, size = 0x8, scoped, tag = 'scoped memory for tpu_custom_call.1']
    #allocation8 [shape = 's32[2]{0}', space=sflag, size = 0x8, scoped, tag = 'scoped memory for tpu_custom_call.1']
    #allocation9 [shape = 'u8[1024]{0}', space=vmem, size = 0x400, scoped, tag = 'input window, operand 5']
    #allocation10 [shape = 's32[2]{0}', space=sflag, size = 0x8, scoped, tag = 'scoped memory for tpu_custom_call.1']
    #allocation11 [shape = 'u8[1024]{0}', space=vmem, size = 0x400, scoped, tag = 'input window, operand 7']
    #allocation12 [shape = 'u8[1024]{0}', space=vmem, size = 0x400, scoped, tag = 'input window, operand 8']
    #allocation13 [shape = 's32[2]{0}', space=sflag, size = 0x8, scoped, tag = 'scoped memory for tpu_custom_call.1']
    #allocation14 [shape = 'u8[1024]{0}', space=vmem, size = 0x400, scoped, tag = 'input window, operand 9']
    #allocation15 [shape = 'u8[1024]{0}', space=vmem, size = 0x400, scoped, tag = 'input window, operand 11']
    #allocation16 [shape = 's32[2]{0}', space=sflag, size = 0x8, scoped, tag = 'scoped memory for tpu_custom_call.1']
    #allocation17 [shape = 'u8[1024]{0}', space=vmem, size = 0x400, scoped, tag = 'input window, operand 13']
    #allocation18 [shape = 'u8[1024]{0}', space=vmem, size = 0x400, scoped, tag = 'input window, operand 14']
    #allocation19 [shape = 's32[2]{0}', space=sflag, size = 0x8, scoped, tag = 'scoped memory for tpu_custom_call.1']
    #allocation20 [shape = 'u8[1024]{0}', space=vmem, size = 0x400, scoped, tag = 'input window, operand 15']
    #allocation21 [shape = 'u8[8192]{0}', space=vmem, size = 0x2000, scoped, tag = 'input window, operand 19, single buffered']
    #allocation22 [shape = 's32[1]{0}', space=sflag, size = 0x4, scoped, tag = 'scoped memory for tpu_custom_call.1']
    #allocation23 [shape = 'u8[8192]{0}', space=vmem, size = 0x2000, scoped, tag = 'input window, operand 21, single buffered']
    #allocation24 [shape = 'u8[8192]{0}', space=vmem, size = 0x2000, scoped, tag = 'input window, operand 22, single buffered']
    #allocation25 [shape = 's32[1]{0}', space=sflag, size = 0x4, scoped, tag = 'scoped memory for tpu_custom_call.1']
    #allocation26 [shape = 'u8[8192]{0}', space=vmem, size = 0x2000, scoped, tag = 'output window, operand 0']
    %29 = vsyncpa [#allocation7], 0
    %30 = vsyncpa [#allocation10], 0
    %s31 = scalar_lea.sflag [#allocation10], 1
    %32 = vsyncpa %s31, 0
    %33 = vsyncpa [#allocation13], 0
    %s34 = scalar_lea.sflag [#allocation13], 1
    %35 = vsyncpa %s34, 0
    %36 = vsyncpa [#allocation16], 0
    %s37 = scalar_lea.sflag [#allocation16], 1
    %38 = vsyncpa %s37, 0
    %39 = vsyncpa [#allocation19], 0
    %s40 = scalar_lea.sflag [#allocation19], 1
    %41 = vsyncpa %s40, 0
    %42 = vsyncpa [#allocation22], 0
    %43 = vsyncpa [#allocation25], 0
    %44 = vsyncpa [#allocation8], 0
    %s45 = scalar_lea.sflag [#allocation8], 1
    %46 = vsyncpa %s45, 0
    loop: start=0, step=1, limit=6
    $region2: #{tpu_custom_call.1} parent=1 // loop_pre_header
      _
    $region3: #{tpu_custom_call.1} parent=1 // loop_header
      %s48 = sphi 0, %s52
      %p49 = scmp.ge.s32.totalorder %s48, 6
      %s55 = sphi 0, %s67
      %s56 = sphi 0, %s63
      %s57 = sphi 0, %s55
      %s58 = sphi 0, %s56
      %s59 = sphi 0, %s57
      %s60 = sphi 0, %s58
      %s70 = sphi 0, %s72
      %s73 = sphi 0, %s70
      %s74 = sphi 0, %s73
      %s90 = sphi 0, %s74
      %s96 = sphi 0, %s98
      %s99 = sphi 0, %s96
      %s100 = sphi 0, %s99
      %s116 = sphi 0, %s100
      %s120 = sphi 0, %s120
      %s122 = sphi 0, %s120
      %s123 = sphi 0, %s122
      %s137 = sphi 0, %s123
      %s141 = sphi 0, %s141
      %s143 = sphi 0, %s141
      %s144 = sphi 0, %s143
      %s158 = sphi 0, %s144
      %s164 = sphi 0, %s166
      %s167 = sphi 0, %s164
      %s168 = sphi 0, %s167
      %s184 = sphi 0, %s168
      %s190 = sphi 0, %s192
      %s193 = sphi 0, %s190
      %s194 = sphi 0, %s193
      %s210 = sphi 0, %s194
      %s216 = sphi 0, %s218
      %s219 = sphi 0, %s216
      %s220 = sphi 0, %s219
      %s236 = sphi 0, %s220
      %s242 = sphi 0, %s244
      %s245 = sphi 0, %s242
      %s246 = sphi 0, %s245
      %s262 = sphi 0, %s246
      %s268 = sphi 0, %s270
      %s271 = sphi 0, %s268
      %s272 = sphi 0, %s271
      %s288 = sphi 0, %s272
      %s294 = sphi 0, %s296
      %s297 = sphi 0, %s294
      %s298 = sphi 0, %s297
      %s314 = sphi 0, %s298
      %s320 = sphi 0, %s322
      %s323 = sphi 0, %s320
      %s324 = sphi 0, %s323
      %s340 = sphi 0, %s324
      %s346 = sphi 0, %s348
      %s349 = sphi 0, %s346
      %s350 = sphi 0, %s349
      %s366 = sphi 0, %s350
      %s372 = sphi 0, %s374
      %s375 = sphi 0, %s372
      %s376 = sphi 0, %s375
      %s392 = sphi 0, %s376
      %s398 = sphi 0, %s400
      %s401 = sphi 0, %s398
      %s402 = sphi 0, %s401
      %s418 = sphi 0, %s402
      %s424 = sphi 0, %s426
      %s427 = sphi 0, %s424
      %s428 = sphi 0, %s427
      %s444 = sphi 0, %s428
      %s450 = sphi 0, %s452
      %s453 = sphi 0, %s450
      %s454 = sphi 0, %s453
      %s470 = sphi 0, %s454
      %s476 = sphi 0, %s478
      %s479 = sphi 0, %s476
      %s480 = sphi 0, %s479
      %s496 = sphi 0, %s480
      %s500 = sphi 0, %s500
      %s502 = sphi 0, %s500
      %s503 = sphi 0, %s502
      %s517 = sphi 0, %s503
      %s521 = sphi 0, %s521
      %s523 = sphi 0, %s521
      %s524 = sphi 0, %s523
      %s538 = sphi 0, %s524
      %s542 = sphi 0, %s542
      %s544 = sphi 0, %s542
      %s545 = sphi 0, %s544
      %s559 = sphi 0, %s545
      %s563 = sphi 0, %s563
      %s565 = sphi 0, %s563
      %s566 = sphi 0, %s565
      %s580 = sphi 0, %s566
      %s584 = sphi 0, %s584
      %s586 = sphi 0, %s584
      %s587 = sphi 0, %s586
      %s601 = sphi 0, %s587
      %s605 = sphi 0, %s605
      %s607 = sphi 0, %s605
      %s608 = sphi 0, %s607
      %s622 = sphi 0, %s608
      %s626 = sphi 0, %s626
      %s628 = sphi 0, %s626
      %s629 = sphi 0, %s628
      %s643 = sphi 0, %s629
      %s649 = sphi 0, %s651
      %s652 = sphi 0, %s649
      %s653 = sphi 0, %s652
      %s669 = sphi 0, %s653
    $region4: #{tpu_custom_call.1} parent=1 // loop_header_branch
      %51 = sbr.rel (%p49) target = $region8
    $region5: #{tpu_custom_call.1} parent=1 // loop_body
      %s53 = ssub.s32 %s48, 1
      %s54 = ssub.s32 %s48, 2
      %s61 = sadd.s32 1, %s56
      %p62 = scmp.ge.s32.totalorder %s61, 2
      %s63 = scalar_select %p62, 0, %s61
      %s64 = sadd.s32 1, %s55
      %s65 = scalar_select %p62, %s64, %s55
      %p66 = scmp.ge.s32.totalorder %s65, 2
      %s67 = scalar_select %p66, 0, %s65
      %s68 = ssub.s32 %s55, %s67
      %p69 = scmp.eq.s32.totalorder %s68, 0
      %s71 = sadd.s32 %s70, 1
      %s72 = scalar_select %p69, %s70, %s71
      %p75 = pneg %p69
      %p76 = scmp.eq.s32.totalorder %s48, 3
      %p77 = por %p75, %p76
      %p78 = scmp.ne.s32.totalorder %s70, %s73
      %p79 = scmp.eq.s32.totalorder %s48, 0
      %p80 = por %p78, %p79
      %p81 = scmp.ne.s32.totalorder %s70, %s73
      %p82 = scmp.eq.s32.totalorder %s53, 3
      %p83 = por %p81, %p82
      %p84 = scmp.ne.s32.totalorder %s73, %s74
      %p85 = scmp.eq.s32.totalorder %s53, 0
      %p86 = por %p84, %p85
      %p87 = scmp.ne.s32.totalorder %s73, %s74
      %p88 = scmp.eq.s32.totalorder %s54, 3
      %p89 = por %p87, %p88
      %p91 = scmp.ne.s32.totalorder %s74, %s90
      %p92 = scmp.eq.s32.totalorder %s54, 0
      %p93 = por %p91, %p92
      %s94 = ssub.s32 %s55, %s67
      %p95 = scmp.eq.s32.totalorder %s94, 0
      %s97 = sadd.s32 %s96, 1
      %s98 = scalar_select %p95, %s96, %s97
      %p101 = pneg %p95
      %p102 = scmp.eq.s32.totalorder %s48, 3
      %p103 = por %p101, %p102
      %p104 = scmp.ne.s32.totalorder %s96, %s99
      %p105 = scmp.eq.s32.totalorder %s48, 0
      %p106 = por %p104, %p105
      %p107 = scmp.ne.s32.totalorder %s96, %s99
      %p108 = scmp.eq.s32.totalorder %s53, 3
      %p109 = por %p107, %p108
      %p110 = scmp.ne.s32.totalorder %s99, %s100
      %p111 = scmp.eq.s32.totalorder %s53, 0
      %p112 = por %p110, %p111
      %p113 = scmp.ne.s32.totalorder %s99, %s100
      %p114 = scmp.eq.s32.totalorder %s54, 3
      %p115 = por %p113, %p114
      %p117 = scmp.ne.s32.totalorder %s100, %s116
      %p118 = scmp.eq.s32.totalorder %s54, 0
      %p119 = por %p117, %p118
      %s121 = sadd.s32 %s120, 1
      %p124 = scmp.eq.s32.totalorder %s48, 3
      %p125 = scmp.ne.s32.totalorder %s120, %s122
      %p126 = scmp.eq.s32.totalorder %s48, 0
      %p127 = por %p125, %p126
      %p128 = scmp.ne.s32.totalorder %s120, %s122
      %p129 = scmp.eq.s32.totalorder %s53, 3
      %p130 = por %p128, %p129
      %p131 = scmp.ne.s32.totalorder %s122, %s123
      %p132 = scmp.eq.s32.totalorder %s53, 0
      %p133 = por %p131, %p132
      %p134 = scmp.ne.s32.totalorder %s122, %s123
      %p135 = scmp.eq.s32.totalorder %s54, 3
      %p136 = por %p134, %p135
      %p138 = scmp.ne.s32.totalorder %s123, %s137
      %p139 = scmp.eq.s32.totalorder %s54, 0
      %p140 = por %p138, %p139
      %s142 = sadd.s32 %s141, 1
      %p145 = scmp.eq.s32.totalorder %s48, 3
      %p146 = scmp.ne.s32.totalorder %s141, %s143
      %p147 = scmp.eq.s32.totalorder %s48, 0
      %p148 = por %p146, %p147
      %p149 = scmp.ne.s32.totalorder %s141, %s143
      %p150 = scmp.eq.s32.totalorder %s53, 3
      %p151 = por %p149, %p150
      %p152 = scmp.ne.s32.totalorder %s143, %s144
      %p153 = scmp.eq.s32.totalorder %s53, 0
      %p154 = por %p152, %p153
      %p155 = scmp.ne.s32.totalorder %s143, %s144
      %p156 = scmp.eq.s32.totalorder %s54, 3
      %p157 = por %p155, %p156
      %p159 = scmp.ne.s32.totalorder %s144, %s158
      %p160 = scmp.eq.s32.totalorder %s54, 0
      %p161 = por %p159, %p160
      %s162 = ssub.s32 %s56, %s63
      %p163 = scmp.eq.s32.totalorder %s162, 0
      %s165 = sadd.s32 %s164, 1
      %s166 = scalar_select %p163, %s164, %s165
      %p169 = pneg %p163
      %p170 = scmp.eq.s32.totalorder %s48, 3
      %p171 = por %p169, %p170
      %p172 = scmp.ne.s32.totalorder %s164, %s167
      %p173 = scmp.eq.s32.totalorder %s48, 0
      %p174 = por %p172, %p173
      %p175 = scmp.ne.s32.totalorder %s164, %s167
      %p176 = scmp.eq.s32.totalorder %s53, 3
      %p177 = por %p175, %p176
      %p178 = scmp.ne.s32.totalorder %s167, %s168
      %p179 = scmp.eq.s32.totalorder %s53, 0
      %p180 = por %p178, %p179
      %p181 = scmp.ne.s32.totalorder %s167, %s168
      %p182 = scmp.eq.s32.totalorder %s54, 3
      %p183 = por %p181, %p182
      %p185 = scmp.ne.s32.totalorder %s168, %s184
      %p186 = scmp.eq.s32.totalorder %s54, 0
      %p187 = por %p185, %p186
      %s188 = ssub.s32 %s56, %s63
      %p189 = scmp.eq.s32.totalorder %s188, 0
      %s191 = sadd.s32 %s190, 1
      %s192 = scalar_select %p189, %s190, %s191
      %p195 = pneg %p189
      %p196 = scmp.eq.s32.totalorder %s48, 3
      %p197 = por %p195, %p196
      %p198 = scmp.ne.s32.totalorder %s190, %s193
      %p199 = scmp.eq.s32.totalorder %s48, 0
      %p200 = por %p198, %p199
      %p201 = scmp.ne.s32.totalorder %s190, %s193
      %p202 = scmp.eq.s32.totalorder %s53, 3
      %p203 = por %p201, %p202
      %p204 = scmp.ne.s32.totalorder %s193, %s194
      %p205 = scmp.eq.s32.totalorder %s53, 0
      %p206 = por %p204, %p205
      %p207 = scmp.ne.s32.totalorder %s193, %s194
      %p208 = scmp.eq.s32.totalorder %s54, 3
      %p209 = por %p207, %p208
      %p211 = scmp.ne.s32.totalorder %s194, %s210
      %p212 = scmp.eq.s32.totalorder %s54, 0
      %p213 = por %p211, %p212
      %s214 = ssub.s32 %s56, %s63
      %p215 = scmp.eq.s32.totalorder %s214, 0
      %s217 = sadd.s32 %s216, 1
      %s218 = scalar_select %p215, %s216, %s217
      %p221 = pneg %p215
      %p222 = scmp.eq.s32.totalorder %s48, 3
      %p223 = por %p221, %p222
      %p224 = scmp.ne.s32.totalorder %s216, %s219
      %p225 = scmp.eq.s32.totalorder %s48, 0
      %p226 = por %p224, %p225
      %p227 = scmp.ne.s32.totalorder %s216, %s219
      %p228 = scmp.eq.s32.totalorder %s53, 3
      %p229 = por %p227, %p228
      %p230 = scmp.ne.s32.totalorder %s219, %s220
      %p231 = scmp.eq.s32.totalorder %s53, 0
      %p232 = por %p230, %p231
      %p233 = scmp.ne.s32.totalorder %s219, %s220
      %p234 = scmp.eq.s32.totalorder %s54, 3
      %p235 = por %p233, %p234
      %p237 = scmp.ne.s32.totalorder %s220, %s236
      %p238 = scmp.eq.s32.totalorder %s54, 0
      %p239 = por %p237, %p238
      %s240 = ssub.s32 %s56, %s63
      %p241 = scmp.eq.s32.totalorder %s240, 0
      %s243 = sadd.s32 %s242, 1
      %s244 = scalar_select %p241, %s242, %s243
      %p247 = pneg %p241
      %p248 = scmp.eq.s32.totalorder %s48, 3
      %p249 = por %p247, %p248
      %p250 = scmp.ne.s32.totalorder %s242, %s245
      %p251 = scmp.eq.s32.totalorder %s48, 0
      %p252 = por %p250, %p251
      %p253 = scmp.ne.s32.totalorder %s242, %s245
      %p254 = scmp.eq.s32.totalorder %s53, 3
      %p255 = por %p253, %p254
      %p256 = scmp.ne.s32.totalorder %s245, %s246
      %p257 = scmp.eq.s32.totalorder %s53, 0
      %p258 = por %p256, %p257
      %p259 = scmp.ne.s32.totalorder %s245, %s246
      %p260 = scmp.eq.s32.totalorder %s54, 3
      %p261 = por %p259, %p260
      %p263 = scmp.ne.s32.totalorder %s246, %s262
      %p264 = scmp.eq.s32.totalorder %s54, 0
      %p265 = por %p263, %p264
      %s266 = ssub.s32 %s56, %s63
      %p267 = scmp.eq.s32.totalorder %s266, 0
      %s269 = sadd.s32 %s268, 1
      %s270 = scalar_select %p267, %s268, %s269
      %p273 = pneg %p267
      %p274 = scmp.eq.s32.totalorder %s48, 3
      %p275 = por %p273, %p274
      %p276 = scmp.ne.s32.totalorder %s268, %s271
      %p277 = scmp.eq.s32.totalorder %s48, 0
      %p278 = por %p276, %p277
      %p279 = scmp.ne.s32.totalorder %s268, %s271
      %p280 = scmp.eq.s32.totalorder %s53, 3
      %p281 = por %p279, %p280
      %p282 = scmp.ne.s32.totalorder %s271, %s272
      %p283 = scmp.eq.s32.totalorder %s53, 0
      %p284 = por %p282, %p283
      %p285 = scmp.ne.s32.totalorder %s271, %s272
      %p286 = scmp.eq.s32.totalorder %s54, 3
      %p287 = por %p285, %p286
      %p289 = scmp.ne.s32.totalorder %s272, %s288
      %p290 = scmp.eq.s32.totalorder %s54, 0
      %p291 = por %p289, %p290
      %s292 = ssub.s32 %s56, %s63
      %p293 = scmp.eq.s32.totalorder %s292, 0
      %s295 = sadd.s32 %s294, 1
      %s296 = scalar_select %p293, %s294, %s295
      %p299 = pneg %p293
      %p300 = scmp.eq.s32.totalorder %s48, 3
      %p301 = por %p299, %p300
      %p302 = scmp.ne.s32.totalorder %s294, %s297
      %p303 = scmp.eq.s32.totalorder %s48, 0
      %p304 = por %p302, %p303
      %p305 = scmp.ne.s32.totalorder %s294, %s297
      %p306 = scmp.eq.s32.totalorder %s53, 3
      %p307 = por %p305, %p306
      %p308 = scmp.ne.s32.totalorder %s297, %s298
      %p309 = scmp.eq.s32.totalorder %s53, 0
      %p310 = por %p308, %p309
      %p311 = scmp.ne.s32.totalorder %s297, %s298
      %p312 = scmp.eq.s32.totalorder %s54, 3
      %p313 = por %p311, %p312
      %p315 = scmp.ne.s32.totalorder %s298, %s314
      %p316 = scmp.eq.s32.totalorder %s54, 0
      %p317 = por %p315, %p316
      %s318 = ssub.s32 %s56, %s63
      %p319 = scmp.eq.s32.totalorder %s318, 0
      %s321 = sadd.s32 %s320, 1
      %s322 = scalar_select %p319, %s320, %s321
      %p325 = pneg %p319
      %p326 = scmp.eq.s32.totalorder %s48, 3
      %p327 = por %p325, %p326
      %p328 = scmp.ne.s32.totalorder %s320, %s323
      %p329 = scmp.eq.s32.totalorder %s48, 0
      %p330 = por %p328, %p329
      %p331 = scmp.ne.s32.totalorder %s320, %s323
      %p332 = scmp.eq.s32.totalorder %s53, 3
      %p333 = por %p331, %p332
      %p334 = scmp.ne.s32.totalorder %s323, %s324
      %p335 = scmp.eq.s32.totalorder %s53, 0
      %p336 = por %p334, %p335
      %p337 = scmp.ne.s32.totalorder %s323, %s324
      %p338 = scmp.eq.s32.totalorder %s54, 3
      %p339 = por %p337, %p338
      %p341 = scmp.ne.s32.totalorder %s324, %s340
      %p342 = scmp.eq.s32.totalorder %s54, 0
      %p343 = por %p341, %p342
      %s344 = ssub.s32 %s56, %s63
      %p345 = scmp.eq.s32.totalorder %s344, 0
      %s347 = sadd.s32 %s346, 1
      %s348 = scalar_select %p345, %s346, %s347
      %p351 = pneg %p345
      %p352 = scmp.eq.s32.totalorder %s48, 3
      %p353 = por %p351, %p352
      %p354 = scmp.ne.s32.totalorder %s346, %s349
      %p355 = scmp.eq.s32.totalorder %s48, 0
      %p356 = por %p354, %p355
      %p357 = scmp.ne.s32.totalorder %s346, %s349
      %p358 = scmp.eq.s32.totalorder %s53, 3
      %p359 = por %p357, %p358
      %p360 = scmp.ne.s32.totalorder %s349, %s350
      %p361 = scmp.eq.s32.totalorder %s53, 0
      %p362 = por %p360, %p361
      %p363 = scmp.ne.s32.totalorder %s349, %s350
      %p364 = scmp.eq.s32.totalorder %s54, 3
      %p365 = por %p363, %p364
      %p367 = scmp.ne.s32.totalorder %s350, %s366
      %p368 = scmp.eq.s32.totalorder %s54, 0
      %p369 = por %p367, %p368
      %s370 = ssub.s32 %s56, %s63
      %p371 = scmp.eq.s32.totalorder %s370, 0
      %s373 = sadd.s32 %s372, 1
      %s374 = scalar_select %p371, %s372, %s373
      %p377 = pneg %p371
      %p378 = scmp.eq.s32.totalorder %s48, 3
      %p379 = por %p377, %p378
      %p380 = scmp.ne.s32.totalorder %s372, %s375
      %p381 = scmp.eq.s32.totalorder %s48, 0
      %p382 = por %p380, %p381
      %p383 = scmp.ne.s32.totalorder %s372, %s375
      %p384 = scmp.eq.s32.totalorder %s53, 3
      %p385 = por %p383, %p384
      %p386 = scmp.ne.s32.totalorder %s375, %s376
      %p387 = scmp.eq.s32.totalorder %s53, 0
      %p388 = por %p386, %p387
      %p389 = scmp.ne.s32.totalorder %s375, %s376
      %p390 = scmp.eq.s32.totalorder %s54, 3
      %p391 = por %p389, %p390
      %p393 = scmp.ne.s32.totalorder %s376, %s392
      %p394 = scmp.eq.s32.totalorder %s54, 0
      %p395 = por %p393, %p394
      %s396 = ssub.s32 %s56, %s63
      %p397 = scmp.eq.s32.totalorder %s396, 0
      %s399 = sadd.s32 %s398, 1
      %s400 = scalar_select %p397, %s398, %s399
      %p403 = pneg %p397
      %p404 = scmp.eq.s32.totalorder %s48, 3
      %p405 = por %p403, %p404
      %p406 = scmp.ne.s32.totalorder %s398, %s401
      %p407 = scmp.eq.s32.totalorder %s48, 0
      %p408 = por %p406, %p407
      %p409 = scmp.ne.s32.totalorder %s398, %s401
      %p410 = scmp.eq.s32.totalorder %s53, 3
      %p411 = por %p409, %p410
      %p412 = scmp.ne.s32.totalorder %s401, %s402
      %p413 = scmp.eq.s32.totalorder %s53, 0
      %p414 = por %p412, %p413
      %p415 = scmp.ne.s32.totalorder %s401, %s402
      %p416 = scmp.eq.s32.totalorder %s54, 3
      %p417 = por %p415, %p416
      %p419 = scmp.ne.s32.totalorder %s402, %s418
      %p420 = scmp.eq.s32.totalorder %s54, 0
      %p421 = por %p419, %p420
      %s422 = ssub.s32 %s56, %s63
      %p423 = scmp.eq.s32.totalorder %s422, 0
      %s425 = sadd.s32 %s424, 1
      %s426 = scalar_select %p423, %s424, %s425
      %p429 = pneg %p423
      %p430 = scmp.eq.s32.totalorder %s48, 3
      %p431 = por %p429, %p430
      %p432 = scmp.ne.s32.totalorder %s424, %s427
      %p433 = scmp.eq.s32.totalorder %s48, 0
      %p434 = por %p432, %p433
      %p435 = scmp.ne.s32.totalorder %s424, %s427
      %p436 = scmp.eq.s32.totalorder %s53, 3
      %p437 = por %p435, %p436
      %p438 = scmp.ne.s32.totalorder %s427, %s428
      %p439 = scmp.eq.s32.totalorder %s53, 0
      %p440 = por %p438, %p439
      %p441 = scmp.ne.s32.totalorder %s427, %s428
      %p442 = scmp.eq.s32.totalorder %s54, 3
      %p443 = por %p441, %p442
      %p445 = scmp.ne.s32.totalorder %s428, %s444
      %p446 = scmp.eq.s32.totalorder %s54, 0
      %p447 = por %p445, %p446
      %s448 = ssub.s32 %s56, %s63
      %p449 = scmp.eq.s32.totalorder %s448, 0
      %s451 = sadd.s32 %s450, 1
      %s452 = scalar_select %p449, %s450, %s451
      %p455 = pneg %p449
      %p456 = scmp.eq.s32.totalorder %s48, 3
      %p457 = por %p455, %p456
      %p458 = scmp.ne.s32.totalorder %s450, %s453
      %p459 = scmp.eq.s32.totalorder %s48, 0
      %p460 = por %p458, %p459
      %p461 = scmp.ne.s32.totalorder %s450, %s453
      %p462 = scmp.eq.s32.totalorder %s53, 3
      %p463 = por %p461, %p462
      %p464 = scmp.ne.s32.totalorder %s453, %s454
      %p465 = scmp.eq.s32.totalorder %s53, 0
      %p466 = por %p464, %p465
      %p467 = scmp.ne.s32.totalorder %s453, %s454
      %p468 = scmp.eq.s32.totalorder %s54, 3
      %p469 = por %p467, %p468
      %p471 = scmp.ne.s32.totalorder %s454, %s470
      %p472 = scmp.eq.s32.totalorder %s54, 0
      %p473 = por %p471, %p472
      %s474 = ssub.s32 %s55, %s67
      %p475 = scmp.eq.s32.totalorder %s474, 0
      %s477 = sadd.s32 %s476, 1
      %s478 = scalar_select %p475, %s476, %s477
      %p481 = pneg %p475
      %p482 = scmp.eq.s32.totalorder %s48, 3
      %p483 = por %p481, %p482
      %p484 = scmp.ne.s32.totalorder %s476, %s479
      %p485 = scmp.eq.s32.totalorder %s48, 0
      %p486 = por %p484, %p485
      %p487 = scmp.ne.s32.totalorder %s476, %s479
      %p488 = scmp.eq.s32.totalorder %s53, 3
      %p489 = por %p487, %p488
      %p490 = scmp.ne.s32.totalorder %s479, %s480
      %p491 = scmp.eq.s32.totalorder %s53, 0
      %p492 = por %p490, %p491
      %p493 = scmp.ne.s32.totalorder %s479, %s480
      %p494 = scmp.eq.s32.totalorder %s54, 3
      %p495 = por %p493, %p494
      %p497 = scmp.ne.s32.totalorder %s480, %s496
      %p498 = scmp.eq.s32.totalorder %s54, 0
      %p499 = por %p497, %p498
      %s501 = sadd.s32 %s500, 1
      %p504 = scmp.eq.s32.totalorder %s48, 3
      %p505 = scmp.ne.s32.totalorder %s500, %s502
      %p506 = scmp.eq.s32.totalorder %s48, 0
      %p507 = por %p505, %p506
      %p508 = scmp.ne.s32.totalorder %s500, %s502
      %p509 = scmp.eq.s32.totalorder %s53, 3
      %p510 = por %p508, %p509
      %p511 = scmp.ne.s32.totalorder %s502, %s503
      %p512 = scmp.eq.s32.totalorder %s53, 0
      %p513 = por %p511, %p512
      %p514 = scmp.ne.s32.totalorder %s502, %s503
      %p515 = scmp.eq.s32.totalorder %s54, 3
      %p516 = por %p514, %p515
      %p518 = scmp.ne.s32.totalorder %s503, %s517
      %p519 = scmp.eq.s32.totalorder %s54, 0
      %p520 = por %p518, %p519
      %s522 = sadd.s32 %s521, 1
      %p525 = scmp.eq.s32.totalorder %s48, 3
      %p526 = scmp.ne.s32.totalorder %s521, %s523
      %p527 = scmp.eq.s32.totalorder %s48, 0
      %p528 = por %p526, %p527
      %p529 = scmp.ne.s32.totalorder %s521, %s523
      %p530 = scmp.eq.s32.totalorder %s53, 3
      %p531 = por %p529, %p530
      %p532 = scmp.ne.s32.totalorder %s523, %s524
      %p533 = scmp.eq.s32.totalorder %s53, 0
      %p534 = por %p532, %p533
      %p535 = scmp.ne.s32.totalorder %s523, %s524
      %p536 = scmp.eq.s32.totalorder %s54, 3
      %p537 = por %p535, %p536
      %p539 = scmp.ne.s32.totalorder %s524, %s538
      %p540 = scmp.eq.s32.totalorder %s54, 0
      %p541 = por %p539, %p540
      %s543 = sadd.s32 %s542, 1
      %p546 = scmp.eq.s32.totalorder %s48, 3
      %p547 = scmp.ne.s32.totalorder %s542, %s544
      %p548 = scmp.eq.s32.totalorder %s48, 0
      %p549 = por %p547, %p548
      %p550 = scmp.ne.s32.totalorder %s542, %s544
      %p551 = scmp.eq.s32.totalorder %s53, 3
      %p552 = por %p550, %p551
      %p553 = scmp.ne.s32.totalorder %s544, %s545
      %p554 = scmp.eq.s32.totalorder %s53, 0
      %p555 = por %p553, %p554
      %p556 = scmp.ne.s32.totalorder %s544, %s545
      %p557 = scmp.eq.s32.totalorder %s54, 3
      %p558 = por %p556, %p557
      %p560 = scmp.ne.s32.totalorder %s545, %s559
      %p561 = scmp.eq.s32.totalorder %s54, 0
      %p562 = por %p560, %p561
      %s564 = sadd.s32 %s563, 1
      %p567 = scmp.eq.s32.totalorder %s48, 3
      %p568 = scmp.ne.s32.totalorder %s563, %s565
      %p569 = scmp.eq.s32.totalorder %s48, 0
      %p570 = por %p568, %p569
      %p571 = scmp.ne.s32.totalorder %s563, %s565
      %p572 = scmp.eq.s32.totalorder %s53, 3
      %p573 = por %p571, %p572
      %p574 = scmp.ne.s32.totalorder %s565, %s566
      %p575 = scmp.eq.s32.totalorder %s53, 0
      %p576 = por %p574, %p575
      %p577 = scmp.ne.s32.totalorder %s565, %s566
      %p578 = scmp.eq.s32.totalorder %s54, 3
      %p579 = por %p577, %p578
      %p581 = scmp.ne.s32.totalorder %s566, %s580
      %p582 = scmp.eq.s32.totalorder %s54, 0
      %p583 = por %p581, %p582
      %s585 = sadd.s32 %s584, 1
      %p588 = scmp.eq.s32.totalorder %s48, 3
      %p589 = scmp.ne.s32.totalorder %s584, %s586
      %p590 = scmp.eq.s32.totalorder %s48, 0
      %p591 = por %p589, %p590
      %p592 = scmp.ne.s32.totalorder %s584, %s586
      %p593 = scmp.eq.s32.totalorder %s53, 3
      %p594 = por %p592, %p593
      %p595 = scmp.ne.s32.totalorder %s586, %s587
      %p596 = scmp.eq.s32.totalorder %s53, 0
      %p597 = por %p595, %p596
      %p598 = scmp.ne.s32.totalorder %s586, %s587
      %p599 = scmp.eq.s32.totalorder %s54, 3
      %p600 = por %p598, %p599
      %p602 = scmp.ne.s32.totalorder %s587, %s601
      %p603 = scmp.eq.s32.totalorder %s54, 0
      %p604 = por %p602, %p603
      %s606 = sadd.s32 %s605, 1
      %p609 = scmp.eq.s32.totalorder %s48, 3
      %p610 = scmp.ne.s32.totalorder %s605, %s607
      %p611 = scmp.eq.s32.totalorder %s48, 0
      %p612 = por %p610, %p611
      %p613 = scmp.ne.s32.totalorder %s605, %s607
      %p614 = scmp.eq.s32.totalorder %s53, 3
      %p615 = por %p613, %p614
      %p616 = scmp.ne.s32.totalorder %s607, %s608
      %p617 = scmp.eq.s32.totalorder %s53, 0
      %p618 = por %p616, %p617
      %p619 = scmp.ne.s32.totalorder %s607, %s608
      %p620 = scmp.eq.s32.totalorder %s54, 3
      %p621 = por %p619, %p620
      %p623 = scmp.ne.s32.totalorder %s608, %s622
      %p624 = scmp.eq.s32.totalorder %s54, 0
      %p625 = por %p623, %p624
      %s627 = sadd.s32 %s626, 1
      %p630 = scmp.eq.s32.totalorder %s48, 3
      %p631 = scmp.ne.s32.totalorder %s626, %s628
      %p632 = scmp.eq.s32.totalorder %s48, 0
      %p633 = por %p631, %p632
      %p634 = scmp.ne.s32.totalorder %s626, %s628
      %p635 = scmp.eq.s32.totalorder %s53, 3
      %p636 = por %p634, %p635
      %p637 = scmp.ne.s32.totalorder %s628, %s629
      %p638 = scmp.eq.s32.totalorder %s53, 0
      %p639 = por %p637, %p638
      %p640 = scmp.ne.s32.totalorder %s628, %s629
      %p641 = scmp.eq.s32.totalorder %s54, 3
      %p642 = por %p640, %p641
      %p644 = scmp.ne.s32.totalorder %s629, %s643
      %p645 = scmp.eq.s32.totalorder %s54, 0
      %p646 = por %p644, %p645
      %s647 = ssub.s32 %s55, %s67
      %p648 = scmp.eq.s32.totalorder %s647, 0
      %s650 = sadd.s32 %s649, 1
      %s651 = scalar_select %p648, %s649, %s650
      %p654 = pneg %p648
      %p655 = scmp.eq.s32.totalorder %s48, 3
      %p656 = por %p654, %p655
      %p657 = scmp.ne.s32.totalorder %s649, %s652
      %p658 = scmp.eq.s32.totalorder %s48, 0
      %p659 = por %p657, %p658
      %p660 = scmp.ne.s32.totalorder %s649, %s652
      %p661 = scmp.eq.s32.totalorder %s53, 3
      %p662 = por %p660, %p661
      %p663 = scmp.ne.s32.totalorder %s652, %s653
      %p664 = scmp.eq.s32.totalorder %s53, 0
      %p665 = por %p663, %p664
      %p666 = scmp.ne.s32.totalorder %s652, %s653
      %p667 = scmp.eq.s32.totalorder %s54, 3
      %p668 = por %p666, %p667
      %p670 = scmp.ne.s32.totalorder %s653, %s669
      %p671 = scmp.eq.s32.totalorder %s54, 0
      %p672 = por %p670, %p671
      %p673 = scmp.le.s32.totalorder 1, %s48
      %p674 = scmp.lt.s32.totalorder %s48, 5
      %p675 = pnand %p673, %p674
      %p676 = pneg %p675
      // Predicated region
      $region9: #{tpu_custom_call.1} parent=5 // pred_check
        _
      $region10: #{tpu_custom_call.1} parent=5 // pred_check_branch
        %678 = sbr.rel (%p675) target = $region12
      $region11: #{tpu_custom_call.1} parent=5 // pred_region
        %s679 = ssub.s32 %s48, 1
        // Predicated region
        $region13: #{tpu_custom_call.1} parent=11 // pred_check
          %p680 = pneg %p133
        $region14: #{tpu_custom_call.1} parent=11 // pred_check_branch
          %682 = sbr.rel (%p680) target = $region16
        $region15: #{tpu_custom_call.1} parent=11 // pred_region
          _
        $region16: #{tpu_custom_call.1} parent=11 // pred_fallthru
          _
        // Predicated region
        $region17: #{tpu_custom_call.1} parent=11 // pred_check
          %p683 = pneg %p154
        $region18: #{tpu_custom_call.1} parent=11 // pred_check_branch
          %685 = sbr.rel (%p683) target = $region20
        $region19: #{tpu_custom_call.1} parent=11 // pred_region
          %687 = vsyncadd [#allocation7], 0
          %s689 = sshll.u32 %s3, 4
          %s690 = int_to_ptr.hbm [resolvable:$true] %s689
          %s691 = sshll.u32 [#allocation6], 4
          %s692 = int_to_ptr.vmem [resolvable:$true] %s691
          %694 = dma.hbm_to_vmem [thread:$0]  %s690, 16, %s692, [#allocation7]
        $region20: #{tpu_custom_call.1} parent=11 // pred_fallthru
          _
        // Predicated region
        $region21: #{tpu_custom_call.1} parent=11 // pred_check
          %p695 = pneg %p513
        $region22: #{tpu_custom_call.1} parent=11 // pred_check_branch
          %697 = sbr.rel (%p695) target = $region24
        $region23: #{tpu_custom_call.1} parent=11 // pred_region
          _
        $region24: #{tpu_custom_call.1} parent=11 // pred_fallthru
          _
        // Predicated region
        $region25: #{tpu_custom_call.1} parent=11 // pred_check
          %p698 = pneg %p534
        $region26: #{tpu_custom_call.1} parent=11 // pred_check_branch
          %700 = sbr.rel (%p698) target = $region28
        $region27: #{tpu_custom_call.1} parent=11 // pred_region
          _
        $region28: #{tpu_custom_call.1} parent=11 // pred_fallthru
          _
        // Predicated region
        $region29: #{tpu_custom_call.1} parent=11 // pred_check
          %p701 = pneg %p555
        $region30: #{tpu_custom_call.1} parent=11 // pred_check_branch
          %703 = sbr.rel (%p701) target = $region32
        $region31: #{tpu_custom_call.1} parent=11 // pred_region
          %705 = vsyncadd [#allocation22], 0
          %s706 = sshll.u32 %s19, 4
          %s707 = int_to_ptr.hbm [resolvable:$true] %s706
          %s708 = sshll.u32 [#allocation21], 4
          %s709 = int_to_ptr.vmem [resolvable:$true] %s708
          %714 = dma.hbm_to_vmem [thread:$0]  %s707, 256, %s709, [#allocation22], 64, 64, 4
        $region32: #{tpu_custom_call.1} parent=11 // pred_fallthru
          _
        // Predicated region
        $region33: #{tpu_custom_call.1} parent=11 // pred_check
          %p715 = pneg %p576
        $region34: #{tpu_custom_call.1} parent=11 // pred_check_branch
          %717 = sbr.rel (%p715) target = $region36
        $region35: #{tpu_custom_call.1} parent=11 // pred_region
          _
        $region36: #{tpu_custom_call.1} parent=11 // pred_fallthru
          _
        // Predicated region
        $region37: #{tpu_custom_call.1} parent=11 // pred_check
          %p718 = pneg %p597
        $region38: #{tpu_custom_call.1} parent=11 // pred_check_branch
          %720 = sbr.rel (%p718) target = $region40
        $region39: #{tpu_custom_call.1} parent=11 // pred_region
          %722 = vsyncadd [#allocation22], 0
          %s723 = sshll.u32 %s21, 4
          %s724 = int_to_ptr.hbm [resolvable:$true] %s723
          %s725 = sshll.u32 [#allocation23], 4
          %s726 = int_to_ptr.vmem [resolvable:$true] %s725
          %731 = dma.hbm_to_vmem [thread:$0]  %s724, 256, %s726, [#allocation22], 64, 64, 4
        $region40: #{tpu_custom_call.1} parent=11 // pred_fallthru
          _
        // Predicated region
        $region41: #{tpu_custom_call.1} parent=11 // pred_check
          %p732 = pneg %p618
        $region42: #{tpu_custom_call.1} parent=11 // pred_check_branch
          %734 = sbr.rel (%p732) target = $region44
        $region43: #{tpu_custom_call.1} parent=11 // pred_region
          %736 = vsyncadd [#allocation25], 0
          %s737 = sshll.u32 %s22, 4
          %s738 = int_to_ptr.hbm [resolvable:$true] %s737
          %s739 = sshll.u32 [#allocation24], 4
          %s740 = int_to_ptr.vmem [resolvable:$true] %s739
          %745 = dma.hbm_to_vmem [thread:$0]  %s738, 256, %s740, [#allocation25], 64, 64, 4
        $region44: #{tpu_custom_call.1} parent=11 // pred_fallthru
          _
        // Predicated region
        $region45: #{tpu_custom_call.1} parent=11 // pred_check
          %p746 = pneg %p639
        $region46: #{tpu_custom_call.1} parent=11 // pred_check_branch
          %748 = sbr.rel (%p746) target = $region48
        $region47: #{tpu_custom_call.1} parent=11 // pred_region
          _
        $region48: #{tpu_custom_call.1} parent=11 // pred_fallthru
          _
      $region12: #{tpu_custom_call.1} parent=5 // pred_fallthru
        _
      %p749 = scmp.lt.s32.totalorder %s48, 4
      // Predicated region
      $region49: #{tpu_custom_call.1} parent=5 // pred_check
        %p750 = pneg %p749
      $region50: #{tpu_custom_call.1} parent=5 // pred_check_branch
        %752 = sbr.rel (%p750) target = $region52
      $region51: #{tpu_custom_call.1} parent=5 // pred_region
        // Predicated region
        $region53: #{tpu_custom_call.1} parent=51 // pred_check
          %p753 = pneg %p80
        $region54: #{tpu_custom_call.1} parent=51 // pred_check_branch
          %755 = sbr.rel (%p753) target = $region56
        $region55: #{tpu_custom_call.1} parent=51 // pred_region
          %p756 = scmp.lt.s32.totalorder %s55, 1
          %s757 = scalar_select %p756, %s55, 1
          %s758 = smul.addr %s757, 4
          %s759 = scalar_lea.vmem %s0, %s758
        $region56: #{tpu_custom_call.1} parent=51 // pred_fallthru
          _
        // Predicated region
        $region57: #{tpu_custom_call.1} parent=51 // pred_check
          %p760 = pneg %p106
        $region58: #{tpu_custom_call.1} parent=51 // pred_check_branch
          %762 = sbr.rel (%p760) target = $region60
        $region59: #{tpu_custom_call.1} parent=51 // pred_region
          %p763 = scmp.lt.s32.totalorder %s55, 1
          %s764 = scalar_select %p763, %s55, 1
          %s765 = scalar_lea.vmem %s1, %s764
        $region60: #{tpu_custom_call.1} parent=51 // pred_fallthru
          _
        // Predicated region
        $region61: #{tpu_custom_call.1} parent=51 // pred_check
          %p766 = pneg %p174
        $region62: #{tpu_custom_call.1} parent=51 // pred_check_branch
          %768 = sbr.rel (%p766) target = $region64
        $region63: #{tpu_custom_call.1} parent=51 // pred_region
          %p769 = scmp.lt.s32.totalorder %s56, 1
          %s770 = scalar_select %p769, %s56, 1
          %s771 = smul.addr %s770, 4
          %s772 = smul.addr %s771, 4
          %s773 = scalar_lea.vmem %s4, %s772
        $region64: #{tpu_custom_call.1} parent=51 // pred_fallthru
          _
        // Predicated region
        $region65: #{tpu_custom_call.1} parent=51 // pred_check
          %p774 = pneg %p200
        $region66: #{tpu_custom_call.1} parent=51 // pred_check_branch
          %776 = sbr.rel (%p774) target = $region68
        $region67: #{tpu_custom_call.1} parent=51 // pred_region
          %s777 = sand.u32 %s48, 1
          %s778 = scalar_lea.sflag [#allocation10], %s777
          %s779 = sand.u32 %s190, 1
          %s780 = scalar_lea.vmem [#allocation9], %s779
          %782 = vsyncadd %s778, 0
          %s783 = scalar_lea.hbm %s5, %s56
          %s785 = sshll.u32 %s783, 4
          %s786 = int_to_ptr.hbm [resolvable:$true] %s785
          %s787 = sshll.u32 %s780, 4
          %s788 = int_to_ptr.vmem [resolvable:$true] %s787
          %790 = dma.hbm_to_vmem [thread:$0]  %s786, 16, %s788, %s778
        $region68: #{tpu_custom_call.1} parent=51 // pred_fallthru
          _
        // Predicated region
        $region69: #{tpu_custom_call.1} parent=51 // pred_check
          %p791 = pneg %p226
        $region70: #{tpu_custom_call.1} parent=51 // pred_check_branch
          %793 = sbr.rel (%p791) target = $region72
        $region71: #{tpu_custom_call.1} parent=51 // pred_region
          %p794 = scmp.lt.s32.totalorder %s56, 1
          %s795 = scalar_select %p794, %s56, 1
          %s796 = smul.addr %s795, 4
          %s797 = smul.addr %s796, 4
          %s798 = scalar_lea.vmem %s6, %s797
        $region72: #{tpu_custom_call.1} parent=51 // pred_fallthru
          _
        // Predicated region
        $region73: #{tpu_custom_call.1} parent=51 // pred_check
          %p799 = pneg %p252
        $region74: #{tpu_custom_call.1} parent=51 // pred_check_branch
          %801 = sbr.rel (%p799) target = $region76
        $region75: #{tpu_custom_call.1} parent=51 // pred_region
          %s802 = sand.u32 %s48, 1
          %s803 = scalar_lea.sflag [#allocation10], %s802
          %s804 = sand.u32 %s242, 1
          %s805 = scalar_lea.vmem [#allocation11], %s804
          %807 = vsyncadd %s803, 0
          %s808 = scalar_lea.hbm %s7, %s56
          %s810 = sshll.u32 %s808, 4
          %s811 = int_to_ptr.hbm [resolvable:$true] %s810
          %s812 = sshll.u32 %s805, 4
          %s813 = int_to_ptr.vmem [resolvable:$true] %s812
          %815 = dma.hbm_to_vmem [thread:$0]  %s811, 16, %s813, %s803
        $region76: #{tpu_custom_call.1} parent=51 // pred_fallthru
          _
        // Predicated region
        $region77: #{tpu_custom_call.1} parent=51 // pred_check
          %p816 = pneg %p278
        $region78: #{tpu_custom_call.1} parent=51 // pred_check_branch
          %818 = sbr.rel (%p816) target = $region80
        $region79: #{tpu_custom_call.1} parent=51 // pred_region
          %s819 = sand.u32 %s48, 1
          %s820 = scalar_lea.sflag [#allocation13], %s819
          %s821 = sand.u32 %s268, 1
          %s822 = scalar_lea.vmem [#allocation12], %s821
          %824 = vsyncadd %s820, 0
          %s825 = scalar_lea.hbm %s8, %s56
          %s827 = sshll.u32 %s825, 4
          %s828 = int_to_ptr.hbm [resolvable:$true] %s827
          %s829 = sshll.u32 %s822, 4
          %s830 = int_to_ptr.vmem [resolvable:$true] %s829
          %832 = dma.hbm_to_vmem [thread:$0]  %s828, 16, %s830, %s820
        $region80: #{tpu_custom_call.1} parent=51 // pred_fallthru
          _
        // Predicated region
        $region81: #{tpu_custom_call.1} parent=51 // pred_check
          %p833 = pneg %p304
        $region82: #{tpu_custom_call.1} parent=51 // pred_check_branch
          %835 = sbr.rel (%p833) target = $region84
        $region83: #{tpu_custom_call.1} parent=51 // pred_region
          %s836 = sand.u32 %s48, 1
          %s837 = scalar_lea.sflag [#allocation13], %s836
          %s838 = sand.u32 %s294, 1
          %s839 = scalar_lea.vmem [#allocation14], %s838
          %841 = vsyncadd %s837, 0
          %s842 = scalar_lea.hbm %s9, %s56
          %s844 = sshll.u32 %s842, 4
          %s845 = int_to_ptr.hbm [resolvable:$true] %s844
          %s846 = sshll.u32 %s839, 4
          %s847 = int_to_ptr.vmem [resolvable:$true] %s846
          %849 = dma.hbm_to_vmem [thread:$0]  %s845, 16, %s847, %s837
        $region84: #{tpu_custom_call.1} parent=51 // pred_fallthru
          _
        // Predicated region
        $region85: #{tpu_custom_call.1} parent=51 // pred_check
          %p850 = pneg %p330
        $region86: #{tpu_custom_call.1} parent=51 // pred_check_branch
          %852 = sbr.rel (%p850) target = $region88
        $region87: #{tpu_custom_call.1} parent=51 // pred_region
          %p853 = scmp.lt.s32.totalorder %s56, 1
          %s854 = scalar_select %p853, %s56, 1
          %s855 = smul.addr %s854, 4
          %s856 = smul.addr %s855, 4
          %s857 = scalar_lea.vmem %s10, %s856
        $region88: #{tpu_custom_call.1} parent=51 // pred_fallthru
          _
        // Predicated region
        $region89: #{tpu_custom_call.1} parent=51 // pred_check
          %p858 = pneg %p356
        $region90: #{tpu_custom_call.1} parent=51 // pred_check_branch
          %860 = sbr.rel (%p858) target = $region92
        $region91: #{tpu_custom_call.1} parent=51 // pred_region
          %s861 = sand.u32 %s48, 1
          %s862 = scalar_lea.sflag [#allocation16], %s861
          %s863 = sand.u32 %s346, 1
          %s864 = scalar_lea.vmem [#allocation15], %s863
          %866 = vsyncadd %s862, 0
          %s867 = scalar_lea.hbm %s11, %s56
          %s869 = sshll.u32 %s867, 4
          %s870 = int_to_ptr.hbm [resolvable:$true] %s869
          %s871 = sshll.u32 %s864, 4
          %s872 = int_to_ptr.vmem [resolvable:$true] %s871
          %874 = dma.hbm_to_vmem [thread:$0]  %s870, 16, %s872, %s862
        $region92: #{tpu_custom_call.1} parent=51 // pred_fallthru
          _
        // Predicated region
        $region93: #{tpu_custom_call.1} parent=51 // pred_check
          %p875 = pneg %p382
        $region94: #{tpu_custom_call.1} parent=51 // pred_check_branch
          %877 = sbr.rel (%p875) target = $region96
        $region95: #{tpu_custom_call.1} parent=51 // pred_region
          %p878 = scmp.lt.s32.totalorder %s56, 1
          %s879 = scalar_select %p878, %s56, 1
          %s880 = smul.addr %s879, 8
          %s881 = smul.addr %s880, 4
          %s882 = scalar_lea.vmem %s12, %s881
        $region96: #{tpu_custom_call.1} parent=51 // pred_fallthru
          _
        // Predicated region
        $region97: #{tpu_custom_call.1} parent=51 // pred_check
          %p883 = pneg %p408
        $region98: #{tpu_custom_call.1} parent=51 // pred_check_branch
          %885 = sbr.rel (%p883) target = $region100
        $region99: #{tpu_custom_call.1} parent=51 // pred_region
          %s886 = sand.u32 %s48, 1
          %s887 = scalar_lea.sflag [#allocation16], %s886
          %s888 = sand.u32 %s398, 1
          %s889 = scalar_lea.vmem [#allocation17], %s888
          %891 = vsyncadd %s887, 0
          %s892 = scalar_lea.hbm %s13, %s56
          %s894 = sshll.u32 %s892, 4
          %s895 = int_to_ptr.hbm [resolvable:$true] %s894
          %s896 = sshll.u32 %s889, 4
          %s897 = int_to_ptr.vmem [resolvable:$true] %s896
          %899 = dma.hbm_to_vmem [thread:$0]  %s895, 16, %s897, %s887
        $region100: #{tpu_custom_call.1} parent=51 // pred_fallthru
          _
        // Predicated region
        $region101: #{tpu_custom_call.1} parent=51 // pred_check
          %p900 = pneg %p434
        $region102: #{tpu_custom_call.1} parent=51 // pred_check_branch
          %902 = sbr.rel (%p900) target = $region104
        $region103: #{tpu_custom_call.1} parent=51 // pred_region
          %s903 = sand.u32 %s48, 1
          %s904 = scalar_lea.sflag [#allocation19], %s903
          %s905 = sand.u32 %s424, 1
          %s906 = scalar_lea.vmem [#allocation18], %s905
          %908 = vsyncadd %s904, 0
          %s909 = scalar_lea.hbm %s14, %s56
          %s911 = sshll.u32 %s909, 4
          %s912 = int_to_ptr.hbm [resolvable:$true] %s911
          %s913 = sshll.u32 %s906, 4
          %s914 = int_to_ptr.vmem [resolvable:$true] %s913
          %916 = dma.hbm_to_vmem [thread:$0]  %s912, 16, %s914, %s904
        $region104: #{tpu_custom_call.1} parent=51 // pred_fallthru
          _
        // Predicated region
        $region105: #{tpu_custom_call.1} parent=51 // pred_check
          %p917 = pneg %p460
        $region106: #{tpu_custom_call.1} parent=51 // pred_check_branch
          %919 = sbr.rel (%p917) target = $region108
        $region107: #{tpu_custom_call.1} parent=51 // pred_region
          %s920 = sand.u32 %s48, 1
          %s921 = scalar_lea.sflag [#allocation19], %s920
          %s922 = sand.u32 %s450, 1
          %s923 = scalar_lea.vmem [#allocation20], %s922
          %925 = vsyncadd %s921, 0
          %s926 = scalar_lea.hbm %s15, %s56
          %s928 = sshll.u32 %s926, 4
          %s929 = int_to_ptr.hbm [resolvable:$true] %s928
          %s930 = sshll.u32 %s923, 4
          %s931 = int_to_ptr.vmem [resolvable:$true] %s930
          %933 = dma.hbm_to_vmem [thread:$0]  %s929, 16, %s931, %s921
        $region108: #{tpu_custom_call.1} parent=51 // pred_fallthru
          _
        // Predicated region
        $region109: #{tpu_custom_call.1} parent=51 // pred_check
          %p934 = pneg %p486
        $region110: #{tpu_custom_call.1} parent=51 // pred_check_branch
          %936 = sbr.rel (%p934) target = $region112
        $region111: #{tpu_custom_call.1} parent=51 // pred_region
          %p937 = scmp.lt.s32.totalorder %s55, 1
          %s938 = scalar_select %p937, %s55, 1
          %s939 = scalar_lea.vmem %s16, %s938
        $region112: #{tpu_custom_call.1} parent=51 // pred_fallthru
          _
      $region52: #{tpu_custom_call.1} parent=5 // pred_fallthru
        _
      %p940 = scmp.le.s32.totalorder 1, %s48
      %p941 = scmp.lt.s32.totalorder %s48, 5
      %p942 = pnand %p940, %p941
      %p943 = pneg %p942
      // Predicated region
      $region113: #{tpu_custom_call.1} parent=5 // pred_check
        _
      $region114: #{tpu_custom_call.1} parent=5 // pred_check_branch
        %945 = sbr.rel (%p942) target = $region116
      $region115: #{tpu_custom_call.1} parent=5 // pred_region
        %s946 = ssub.s32 %s48, 1
        // Predicated region
        $region117: #{tpu_custom_call.1} parent=115 // pred_check
          %p947 = pneg %p154
        $region118: #{tpu_custom_call.1} parent=115 // pred_check_branch
          %949 = sbr.rel (%p947) target = $region120
        $region119: #{tpu_custom_call.1} parent=115 // pred_region
          %951 = dma.done [#allocation7], 16
        $region120: #{tpu_custom_call.1} parent=115 // pred_fallthru
          _
        %s952 = sand.u32 %s53, 1
        %s953 = scalar_lea.sflag [#allocation10], %s952
        %s954 = sand.u32 %s193, 1
        %s955 = scalar_lea.vmem [#allocation9], %s954
        // Predicated region
        $region121: #{tpu_custom_call.1} parent=115 // pred_check
          %p956 = pneg %p206
        $region122: #{tpu_custom_call.1} parent=115 // pred_check_branch
          %958 = sbr.rel (%p956) target = $region124
        $region123: #{tpu_custom_call.1} parent=115 // pred_region
          %960 = dma.done %s953, 16
        $region124: #{tpu_custom_call.1} parent=115 // pred_fallthru
          _
        %s961 = sand.u32 %s53, 1
        %s962 = scalar_lea.sflag [#allocation10], %s961
        %s963 = sand.u32 %s245, 1
        %s964 = scalar_lea.vmem [#allocation11], %s963
        // Predicated region
        $region125: #{tpu_custom_call.1} parent=115 // pred_check
          %p965 = pneg %p258
        $region126: #{tpu_custom_call.1} parent=115 // pred_check_branch
          %967 = sbr.rel (%p965) target = $region128
        $region127: #{tpu_custom_call.1} parent=115 // pred_region
          %969 = dma.done %s962, 16
        $region128: #{tpu_custom_call.1} parent=115 // pred_fallthru
          _
        %s970 = sand.u32 %s53, 1
        %s971 = scalar_lea.sflag [#allocation13], %s970
        %s972 = sand.u32 %s271, 1
        %s973 = scalar_lea.vmem [#allocation12], %s972
        // Predicated region
        $region129: #{tpu_custom_call.1} parent=115 // pred_check
          %p974 = pneg %p284
        $region130: #{tpu_custom_call.1} parent=115 // pred_check_branch
          %976 = sbr.rel (%p974) target = $region132
        $region131: #{tpu_custom_call.1} parent=115 // pred_region
          %978 = dma.done %s971, 16
        $region132: #{tpu_custom_call.1} parent=115 // pred_fallthru
          _
        %s979 = sand.u32 %s53, 1
        %s980 = scalar_lea.sflag [#allocation13], %s979
        %s981 = sand.u32 %s297, 1
        %s982 = scalar_lea.vmem [#allocation14], %s981
        // Predicated region
        $region133: #{tpu_custom_call.1} parent=115 // pred_check
          %p983 = pneg %p310
        $region134: #{tpu_custom_call.1} parent=115 // pred_check_branch
          %985 = sbr.rel (%p983) target = $region136
        $region135: #{tpu_custom_call.1} parent=115 // pred_region
          %987 = dma.done %s980, 16
        $region136: #{tpu_custom_call.1} parent=115 // pred_fallthru
          _
        %s988 = sand.u32 %s53, 1
        %s989 = scalar_lea.sflag [#allocation16], %s988
        %s990 = sand.u32 %s349, 1
        %s991 = scalar_lea.vmem [#allocation15], %s990
        // Predicated region
        $region137: #{tpu_custom_call.1} parent=115 // pred_check
          %p992 = pneg %p362
        $region138: #{tpu_custom_call.1} parent=115 // pred_check_branch
          %994 = sbr.rel (%p992) target = $region140
        $region139: #{tpu_custom_call.1} parent=115 // pred_region
          %996 = dma.done %s989, 16
        $region140: #{tpu_custom_call.1} parent=115 // pred_fallthru
          _
        %s997 = sand.u32 %s53, 1
        %s998 = scalar_lea.sflag [#allocation16], %s997
        %s999 = sand.u32 %s401, 1
        %s1000 = scalar_lea.vmem [#allocation17], %s999
        // Predicated region
        $region141: #{tpu_custom_call.1} parent=115 // pred_check
          %p1001 = pneg %p414
        $region142: #{tpu_custom_call.1} parent=115 // pred_check_branch
          %1003 = sbr.rel (%p1001) target = $region144
        $region143: #{tpu_custom_call.1} parent=115 // pred_region
          %1005 = dma.done %s998, 16
        $region144: #{tpu_custom_call.1} parent=115 // pred_fallthru
          _
        %s1006 = sand.u32 %s53, 1
        %s1007 = scalar_lea.sflag [#allocation19], %s1006
        %s1008 = sand.u32 %s427, 1
        %s1009 = scalar_lea.vmem [#allocation18], %s1008
        // Predicated region
        $region145: #{tpu_custom_call.1} parent=115 // pred_check
          %p1010 = pneg %p440
        $region146: #{tpu_custom_call.1} parent=115 // pred_check_branch
          %1012 = sbr.rel (%p1010) target = $region148
        $region147: #{tpu_custom_call.1} parent=115 // pred_region
          %1014 = dma.done %s1007, 16
        $region148: #{tpu_custom_call.1} parent=115 // pred_fallthru
          _
        %s1015 = sand.u32 %s53, 1
        %s1016 = scalar_lea.sflag [#allocation19], %s1015
        %s1017 = sand.u32 %s453, 1
        %s1018 = scalar_lea.vmem [#allocation20], %s1017
        // Predicated region
        $region149: #{tpu_custom_call.1} parent=115 // pred_check
          %p1019 = pneg %p466
        $region150: #{tpu_custom_call.1} parent=115 // pred_check_branch
          %1021 = sbr.rel (%p1019) target = $region152
        $region151: #{tpu_custom_call.1} parent=115 // pred_region
          %1023 = dma.done %s1016, 16
        $region152: #{tpu_custom_call.1} parent=115 // pred_fallthru
          _
        // Predicated region
        $region153: #{tpu_custom_call.1} parent=115 // pred_check
          %p1024 = pneg %p555
        $region154: #{tpu_custom_call.1} parent=115 // pred_check_branch
          %1026 = sbr.rel (%p1024) target = $region156
        $region155: #{tpu_custom_call.1} parent=115 // pred_region
          %1028 = dma.done [#allocation22], 256
        $region156: #{tpu_custom_call.1} parent=115 // pred_fallthru
          _
        // Predicated region
        $region157: #{tpu_custom_call.1} parent=115 // pred_check
          %p1029 = pneg %p597
        $region158: #{tpu_custom_call.1} parent=115 // pred_check_branch
          %1031 = sbr.rel (%p1029) target = $region160
        $region159: #{tpu_custom_call.1} parent=115 // pred_region
          %1033 = dma.done [#allocation22], 256
        $region160: #{tpu_custom_call.1} parent=115 // pred_fallthru
          _
        // Predicated region
        $region161: #{tpu_custom_call.1} parent=115 // pred_check
          %p1034 = pneg %p618
        $region162: #{tpu_custom_call.1} parent=115 // pred_check_branch
          %1036 = sbr.rel (%p1034) target = $region164
        $region163: #{tpu_custom_call.1} parent=115 // pred_region
          %1038 = dma.done [#allocation25], 256
        $region164: #{tpu_custom_call.1} parent=115 // pred_fallthru
          _
        %p1039 = scmp.lt.s32.totalorder %s57, 1
        %s1040 = scalar_select %p1039, %s57, 1
        %s1041 = smul.addr %s1040, 4
        %s1042 = scalar_lea.vmem %s0, %s1041
        %p1043 = pneg %p86
        %p1044 = pneg %p83
        %p1045 = scmp.lt.s32.totalorder %s57, 1
        %s1046 = scalar_select %p1045, %s57, 1
        %s1047 = scalar_lea.vmem %s1, %s1046
        %p1048 = pneg %p112
        %p1049 = pneg %p109
        %p1050 = pneg %p133
        %p1051 = pneg %p130
        %p1052 = pneg %p154
        %p1053 = pneg %p151
        %p1054 = scmp.lt.s32.totalorder %s58, 1
        %s1055 = scalar_select %p1054, %s58, 1
        %s1056 = smul.addr %s1055, 4
        %s1057 = smul.addr %s1056, 4
        %s1058 = scalar_lea.vmem %s4, %s1057
        %p1059 = pneg %p180
        %p1060 = pneg %p177
        %s1061 = sand.u32 %s53, 1
        %s1062 = scalar_lea.sflag [#allocation10], %s1061
        %s1063 = sand.u32 %s193, 1
        %s1064 = scalar_lea.vmem [#allocation9], %s1063
        %p1065 = pneg %p206
        %p1066 = pneg %p203
        %p1067 = scmp.lt.s32.totalorder %s58, 1
        %s1068 = scalar_select %p1067, %s58, 1
        %s1069 = smul.addr %s1068, 4
        %s1070 = smul.addr %s1069, 4
        %s1071 = scalar_lea.vmem %s6, %s1070
        %p1072 = pneg %p232
        %p1073 = pneg %p229
        %s1074 = sand.u32 %s53, 1
        %s1075 = scalar_lea.sflag [#allocation10], %s1074
        %s1076 = sand.u32 %s245, 1
        %s1077 = scalar_lea.vmem [#allocation11], %s1076
        %p1078 = pneg %p258
        %p1079 = pneg %p255
        %s1080 = sand.u32 %s53, 1
        %s1081 = scalar_lea.sflag [#allocation13], %s1080
        %s1082 = sand.u32 %s271, 1
        %s1083 = scalar_lea.vmem [#allocation12], %s1082
        %p1084 = pneg %p284
        %p1085 = pneg %p281
        %s1086 = sand.u32 %s53, 1
        %s1087 = scalar_lea.sflag [#allocation13], %s1086
        %s1088 = sand.u32 %s297, 1
        %s1089 = scalar_lea.vmem [#allocation14], %s1088
        %p1090 = pneg %p310
        %p1091 = pneg %p307
        %p1092 = scmp.lt.s32.totalorder %s58, 1
        %s1093 = scalar_select %p1092, %s58, 1
        %s1094 = smul.addr %s1093, 4
        %s1095 = smul.addr %s1094, 4
        %s1096 = scalar_lea.vmem %s10, %s1095
        %p1097 = pneg %p336
        %p1098 = pneg %p333
        %s1099 = sand.u32 %s53, 1
        %s1100 = scalar_lea.sflag [#allocation16], %s1099
        %s1101 = sand.u32 %s349, 1
        %s1102 = scalar_lea.vmem [#allocation15], %s1101
        %p1103 = pneg %p362
        %p1104 = pneg %p359
        %p1105 = scmp.lt.s32.totalorder %s58, 1
        %s1106 = scalar_select %p1105, %s58, 1
        %s1107 = smul.addr %s1106, 8
        %s1108 = smul.addr %s1107, 4
        %s1109 = scalar_lea.vmem %s12, %s1108
        %p1110 = pneg %p388
        %p1111 = pneg %p385
        %s1112 = sand.u32 %s53, 1
        %s1113 = scalar_lea.sflag [#allocation16], %s1112
        %s1114 = sand.u32 %s401, 1
        %s1115 = scalar_lea.vmem [#allocation17], %s1114
        %p1116 = pneg %p414
        %p1117 = pneg %p411
        %s1118 = sand.u32 %s53, 1
        %s1119 = scalar_lea.sflag [#allocation19], %s1118
        %s1120 = sand.u32 %s427, 1
        %s1121 = scalar_lea.vmem [#allocation18], %s1120
        %p1122 = pneg %p440
        %p1123 = pneg %p437
        %s1124 = sand.u32 %s53, 1
        %s1125 = scalar_lea.sflag [#allocation19], %s1124
        %s1126 = sand.u32 %s453, 1
        %s1127 = scalar_lea.vmem [#allocation20], %s1126
        %p1128 = pneg %p466
        %p1129 = pneg %p463
        %p1130 = scmp.lt.s32.totalorder %s57, 1
        %s1131 = scalar_select %p1130, %s57, 1
        %s1132 = scalar_lea.vmem %s16, %s1131
        %p1133 = pneg %p492
        %p1134 = pneg %p489
        %p1135 = pneg %p513
        %p1136 = pneg %p510
        %p1137 = pneg %p534
        %p1138 = pneg %p531
        %p1139 = pneg %p555
        %p1140 = pneg %p552
        %p1141 = pneg %p576
        %p1142 = pneg %p573
        %p1143 = pneg %p597
        %p1144 = pneg %p594
        %p1145 = pneg %p618
        %p1146 = pneg %p615
        %p1147 = pneg %p639
        %p1148 = pneg %p636
        %p1149 = pneg %p665
        %p1150 = pneg %p662
        %s1151 = sand.u32 %s652, 1
        %s1152 = scalar_lea.sflag [#allocation8], %s1151
        %s1153 = sand.u32 %s652, 1
        %s1154 = smul.addr %s1153, 8
        %s1155 = scalar_lea.vmem [#allocation26], %s1154
        %p1156 = scmp.lt.s32.totalorder %s57, 1
        %s1157 = scalar_select %p1156, %s57, 1
        %s1158 = smul.addr %s1157, 4
        %s1159 = scalar_lea.vmem %s0, %s1158
        %p1160 = scmp.lt.s32.totalorder %s57, 1
        %s1161 = scalar_select %p1160, %s57, 1
        %s1162 = scalar_lea.vmem %s1, %s1161
        %p1163 = scmp.lt.s32.totalorder %s58, 1
        %s1164 = scalar_select %p1163, %s58, 1
        %s1165 = smul.addr %s1164, 4
        %s1166 = smul.addr %s1165, 4
        %s1167 = scalar_lea.vmem %s4, %s1166
        %p1168 = scmp.lt.s32.totalorder %s58, 1
        %s1169 = scalar_select %p1168, %s58, 1
        %s1170 = smul.addr %s1169, 4
        %s1171 = smul.addr %s1170, 4
        %s1172 = scalar_lea.vmem %s6, %s1171
        %p1173 = scmp.lt.s32.totalorder %s58, 1
        %s1174 = scalar_select %p1173, %s58, 1
        %s1175 = smul.addr %s1174, 4
        %s1176 = smul.addr %s1175, 4
        %s1177 = scalar_lea.vmem %s10, %s1176
        %p1178 = scmp.lt.s32.totalorder %s58, 1
        %s1179 = scalar_select %p1178, %s58, 1
        %s1180 = smul.addr %s1179, 8
        %s1181 = smul.addr %s1180, 4
        %s1182 = scalar_lea.vmem %s12, %s1181
        %p1183 = scmp.lt.s32.totalorder %s57, 1
        %s1184 = scalar_select %p1183, %s57, 1
        %s1185 = scalar_lea.vmem %s16, %s1184
        %p1187 = scmp.eq.s32.totalorder %s58, 0
        // Predicated region
        $region165: #{tpu_custom_call.1} parent=115 // pred_check
          %p1188 = pneg %p1187
        $region166: #{tpu_custom_call.1} parent=115 // pred_check_branch
          %1190 = sbr.rel (%p1188) target = $region168
        $region167: #{tpu_custom_call.1} parent=115 // pred_region
          %v1191 = vld [vmem:[%s1159] sm:$0xf]
          %v1192 = vunpack.c.l.bf16 %v1191
          %v1193 = vld [vmem:[%s2] sm:$0x1]
          %v1194 = vld [vmem:[#allocation6] sm:$0x1]
          %vm1195 = vcmask 261120
          %v1196 = vsel %vm1195, %v1192, 0.0
          %1197 = vadd.xlane.f32.xlu0 %v1196
          %v1198 = vpop.xlane.xlu0 %1197
          %v1199 = vrcp.pop 32.0
          %v1200 = vmul.f32 32.0, %v1199
          %v1201 = vsub.f32 1.0, %v1200
          %v1202 = vmul.f32 %v1199, %v1201
          %v1203 = vadd.f32 %v1199, %v1202
          %vm1204 = vweird.f32 %v1199
          %v1205 = vsel %vm1204, %v1199, %v1203
          %v1206 = vmul.f32 %v1198, %v1205
          %v1207 = vsub.f32 %v1192, %v1206
          %v1208 = vmul.f32 %v1207, %v1207
          %v1209 = vsel %vm1195, %v1208, 0.0
          %1210 = vadd.xlane.f32.xlu0 %v1209
          %v1211 = vpop.xlane.xlu0 %1210
          %v1212 = vmul.f32 %v1211, %v1205
          %v1213 = vadd.f32 %v1212, 1e-12
          %v1214 = vrsqrt.pop %v1213
          %v1215 = vmul.f32 %v1214, %v1213
          %v1216 = vmul.f32 %v1215, %v1214
          %v1217 = vmul.f32 0.5, %v1216
          %v1218 = vsub.f32 1.5, %v1217
          %v1219 = vmul.f32 %v1214, %v1218
          %vm1220 = vweird.f32 %v1213
          %vm1221 = vweird.f32 %v1214
          %vm1222 = vmor %vm1220, %vm1221
          %v1223 = vsel %vm1222, %v1214, %v1219
          %v1224 = vmul.f32 %v1207, %v1223
          %v1226 = vperm.slane %v1193, 0
          %v1228 = vmul.f32 %v1224, %v1226
          %v1230 = vperm.slane %v1194, 0
          %v1232 = vadd.f32 %v1228, %v1230
          %1233 = vst.msk [vmem:[#allocation2] sm:$0xff] %vm1195, %v1232
        $region168: #{tpu_custom_call.1} parent=115 // pred_fallthru
          _
        %v1234 = vld [vmem:[#allocation2] sm:$0xff]
        %v1235 = vpack.c.bf16 %v1234, %v1234
        %v1236 = vld [vmem:[%s1167] sm:$0xf]
        %v1237 = vld [vmem:[%s1167 + $0x4] sm:$0xf]
        %v1238 = vld [vmem:[%s1167 + $0x8] sm:$0xf]
        %v1239 = vld [vmem:[%s1167 + $0xc] sm:$0xf]
        %v1240 = vld [vmem:[%s955] sm:$0x1]
        %v1242 = vperm.slane %v1240, 0
        %v1248 = vunpack.c.l.b16 %v1236
        %v1249 = vunpack.c.l.b16 %v1237
        %v1250 = vunpack.c.l.b16 %v1238
        %v1251 = vunpack.c.l.b16 %v1239
        %v1252 = vpack.c.b16 %v1249, %v1248
        %v1253 = vpack.c.b16 %v1251, %v1250
        %vm1256 = vcmask 261120
        %v1258 = vsel %vm1256, %v1235, 0
        %1260 = vmatpush.bf16.msra.mxu0 0
        %1261 = vmatpush.bf16.msra.mxu0 0
        %1262 = vmatpush.bf16.msra.mxu0 0
        %1263 = vmatpush.bf16.msra.mxu0 0
        %1264 = vmatpush.bf16.msra.mxu0 0
        %1265 = vmatpush.bf16.msra.mxu0 0
        %1266 = vmatpush.bf16.msra.mxu0 %v1253
        %1267 = vmatpush.bf16.msra.mxu0 %v1252
        %1268 = vmatmul.bf16.gmra.mxu0 %v1258
        %v1269 = vpop.f32.mrf.mxu0
        %v1270 = vadd.f32 %v1242, %v1269
        %v1271 = vpop.f32.mrf.mxu0
        %1272 = vdwg.mxu0
        %v1273 = vpack.c.bf16 %v1270, %v1270
        %vm1274 = vcmask 781312
        %1275 = vst.msk [vmem:[#allocation3] sm:$0xf] %vm1274, %v1273
        %v1276 = vld [vmem:[#allocation3] sm:$0xf]
        %vm1277 = vcmask 125952
        %1278 = vst.msk [vmem:[#allocation4] sm:$0xf] %vm1277, %v1276
        %v1279 = vld [vmem:[#allocation3] sm:$0xf]
        %1281 = vrot.lane.b32.xlu0 %v1279, 112
        %v1282 = vpop.permute.xlu0 %1281
        %s1284 = scalar_lea.vmem [#allocation4], 4
        %1285 = vst.msk [vmem:[%s1284] sm:$0xf] %vm1277, %v1282
        %v1286 = vld [vmem:[#allocation3] sm:$0xf]
        %1288 = vrot.lane.b32.xlu0 %v1286, 96
        %v1289 = vpop.permute.xlu0 %1288
        %s1291 = scalar_lea.vmem [#allocation4], 8
        %1292 = vst.msk [vmem:[%s1291] sm:$0xf] %vm1277, %v1289
        %v1293 = vld [vmem:[#allocation3] sm:$0xf]
        %1295 = vrot.lane.b32.xlu0 %v1293, 80
        %v1296 = vpop.permute.xlu0 %1295
        %s1298 = scalar_lea.vmem [#allocation4], 12
        %1299 = vst.msk [vmem:[%s1298] sm:$0xf] %vm1277, %v1296
        %v1300 = vld [vmem:[#allocation3] sm:$0xf]
        %1302 = vrot.lane.b32.xlu0 %v1300, 64
        %v1303 = vpop.permute.xlu0 %1302
        %s1305 = scalar_lea.vmem [#allocation4], 16
        %1306 = vst.msk [vmem:[%s1305] sm:$0xf] %vm1277, %v1303
        %v1307 = vld [vmem:[#allocation3] sm:$0xf]
        %1309 = vrot.lane.b32.xlu0 %v1307, 48
        %v1310 = vpop.permute.xlu0 %1309
        %s1312 = scalar_lea.vmem [#allocation4], 20
        %1313 = vst.msk [vmem:[%s1312] sm:$0xf] %vm1277, %v1310
        %v1314 = vld [vmem:[#allocation4] sm:$0xf]
        %v1315 = vld [vmem:[#allocation4 + $0x4] sm:$0xf]
        %v1316 = vld [vmem:[%s1291] sm:$0xf]
        %v1317 = vld [vmem:[%s1291 + $0x4] sm:$0xf]
        %v1318 = vld [vmem:[%s1305] sm:$0xf]
        %v1319 = vld [vmem:[%s1305 + $0x4] sm:$0xf]
        %v1320 = vld [vmem:[%s1162] sm:$0x1]
        %v1322 = vperm.slane %v1320, 0
        %vm1324 = vcmask 130048
        %v1326 = vsel %vm1324, %v1314, 0
        %v1329 = vsel %vm1324, %v1316, 0
        %1331 = vmatpush.bf16.xpose.msra.mxu0 0
        %1332 = vmatpush.bf16.xpose.msra.mxu0 0
        %1333 = vmatpush.bf16.xpose.msra.mxu0 0
        %1334 = vmatpush.bf16.xpose.msra.mxu0 0
        %1335 = vmatpush.bf16.xpose.msra.mxu0 0
        %1336 = vmatpush.bf16.xpose.msra.mxu0 0
        %1337 = vmatpush.bf16.xpose.msra.mxu0 0
        %1338 = vmatpush.bf16.xpose.msra.mxu0 %v1329
        %1339 = vmatmul.bf16.gmra.mxu0 %v1326
        %v1340 = vpop.f32.mrf.mxu0
        %v1341 = vadd.f32 %v1322, %v1340
        %v1342 = vpop.f32.mrf.mxu0
        %1343 = vdwg.mxu0
        %v1345 = vsel %vm1324, %v1315, 0
        %v1348 = vsel %vm1324, %v1317, 0
        %1350 = vmatpush.bf16.xpose.msra.mxu0 0
        %1351 = vmatpush.bf16.xpose.msra.mxu0 0
        %1352 = vmatpush.bf16.xpose.msra.mxu0 0
        %1353 = vmatpush.bf16.xpose.msra.mxu0 0
        %1354 = vmatpush.bf16.xpose.msra.mxu0 0
        %1355 = vmatpush.bf16.xpose.msra.mxu0 0
        %1356 = vmatpush.bf16.xpose.msra.mxu0 0
        %1357 = vmatpush.bf16.xpose.msra.mxu0 %v1348
        %1358 = vmatmul.bf16.gmra.mxu0 %v1345
        %v1359 = vpop.f32.mrf.mxu0
        %v1360 = vadd.f32 %v1322, %v1359
        %v1361 = vpop.f32.mrf.mxu0
        %1362 = vdwg.mxu0
        %vm1363 = vcmask 64512
        %v1364 = vsel %vm1363, %v1341, -inf
        %1365 = vmax.xlane.f32.xlu0 %v1364
        %v1366 = vpop.xlane.xlu0 %1365
        %v1367 = vsel %vm1363, %v1360, -inf
        %1368 = vmax.xlane.f32.xlu0 %v1367
        %v1369 = vpop.xlane.xlu0 %1368
        %v1370 = vsub.f32 %v1341, %v1366
        %v1371 = vsub.f32 %v1360, %v1369
        %v1372 = vmul.f32 %v1370, 1.442695
        %v1373 = vpow.pop %v1372
        %v1374 = vmul.f32 %v1371, 1.442695
        %v1375 = vpow.pop %v1374
        %v1376 = vsel %vm1363, %v1373, 0.0
        %1377 = vadd.xlane.f32.xlu0 %v1376
        %v1378 = vpop.xlane.xlu0 %1377
        %v1379 = vsel %vm1363, %v1375, 0.0
        %1380 = vadd.xlane.f32.xlu0 %v1379
        %v1381 = vpop.xlane.xlu0 %1380
        %v1382 = vrcp.pop %v1378
        %v1383 = vrcp.pop %v1381
        %v1384 = vmul.f32 %v1373, %v1382
        %v1385 = vmul.f32 %v1375, %v1383
        %v1386 = vpack.c.bf16 %v1384, %v1384
        %v1387 = vpack.c.bf16 %v1385, %v1385
        %v1389 = vsel %vm1363, %v1386, 0
        %vm1391 = vcmask 1043456
        %v1393 = vsel %vm1391, %v1318, 0
        %1395 = vmatpush.bf16.msra.mxu0 0
        %1396 = vmatpush.bf16.msra.mxu0 0
        %1397 = vmatpush.bf16.msra.mxu0 0
        %1398 = vmatpush.bf16.msra.mxu0 0
        %1399 = vmatpush.bf16.msra.mxu0 0
        %1400 = vmatpush.bf16.msra.mxu0 0
        %1401 = vmatpush.bf16.msra.mxu0 0
        %1402 = vmatpush.bf16.msra.mxu0 %v1393
        %1403 = vmatmul.bf16.gmra.mxu0 %v1389
        %v1404 = vpop.f32.mrf.mxu0
        %v1405 = vadd.f32 0.0, %v1404
        %v1406 = vpop.f32.mrf.mxu0
        %1407 = vdwg.mxu0
        %v1409 = vsel %vm1363, %v1387, 0
        %v1412 = vsel %vm1391, %v1319, 0
        %1414 = vmatpush.bf16.msra.mxu0 0
        %1415 = vmatpush.bf16.msra.mxu0 0
        %1416 = vmatpush.bf16.msra.mxu0 0
        %1417 = vmatpush.bf16.msra.mxu0 0
        %1418 = vmatpush.bf16.msra.mxu0 0
        %1419 = vmatpush.bf16.msra.mxu0 0
        %1420 = vmatpush.bf16.msra.mxu0 0
        %1421 = vmatpush.bf16.msra.mxu0 %v1412
        %1422 = vmatmul.bf16.gmra.mxu0 %v1409
        %v1423 = vpop.f32.mrf.mxu0
        %v1424 = vadd.f32 0.0, %v1423
        %v1425 = vpop.f32.mrf.mxu0
        %1426 = vdwg.mxu0
        %v1427 = vpack.c.bf16 %v1405, %v1405
        %1428 = vst.msk [vmem:[#allocation5] sm:$0xf] %vm1277, %v1427
        %v1429 = vpack.c.bf16 %v1424, %v1424
        %1431 = vrot.lane.b32.xlu0 %v1429, 16
        %v1432 = vpop.permute.xlu0 %1431
        %vm1434 = vcmask 257152
        %1435 = vst.msk [vmem:[#allocation5] sm:$0xf] %vm1434, %v1432
        %v1436 = vld [vmem:[#allocation5] sm:$0xf]
        %v1437 = vld [vmem:[%s1172] sm:$0xf]
        %v1438 = vld [vmem:[%s1172 + $0x4] sm:$0xf]
        %v1439 = vld [vmem:[%s1172 + $0x8] sm:$0xf]
        %v1440 = vld [vmem:[%s1172 + $0xc] sm:$0xf]
        %v1441 = vld [vmem:[%s964] sm:$0x1]
        %v1443 = vperm.slane %v1441, 0
        %v1449 = vunpack.c.l.b16 %v1437
        %v1450 = vunpack.c.l.b16 %v1438
        %v1451 = vunpack.c.l.b16 %v1439
        %v1452 = vunpack.c.l.b16 %v1440
        %v1453 = vpack.c.b16 %v1450, %v1449
        %v1454 = vpack.c.b16 %v1452, %v1451
        %v1458 = vsel %vm1256, %v1436, 0
        %1460 = vmatpush.bf16.msra.mxu0 0
        %1461 = vmatpush.bf16.msra.mxu0 0
        %1462 = vmatpush.bf16.msra.mxu0 0
        %1463 = vmatpush.bf16.msra.mxu0 0
        %1464 = vmatpush.bf16.msra.mxu0 0
        %1465 = vmatpush.bf16.msra.mxu0 0
        %1466 = vmatpush.bf16.msra.mxu0 %v1454
        %1467 = vmatpush.bf16.msra.mxu0 %v1453
        %1468 = vmatmul.bf16.gmra.mxu0 %v1458
        %v1469 = vpop.f32.mrf.mxu0
        %v1470 = vadd.f32 %v1443, %v1469
        %v1471 = vpop.f32.mrf.mxu0
        %1472 = vdwg.mxu0
        %v1473 = vadd.f32 %v1234, %v1470
        %v1474 = vld [vmem:[%s973] sm:$0x1]
        %v1475 = vld [vmem:[%s982] sm:$0x1]
        %v1476 = vsel %vm1256, %v1473, 0.0
        %1477 = vadd.xlane.f32.xlu0 %v1476
        %v1478 = vpop.xlane.xlu0 %1477
        %v1479 = vrcp.pop 32.0
        %v1480 = vmul.f32 32.0, %v1479
        %v1481 = vsub.f32 1.0, %v1480
        %v1482 = vmul.f32 %v1479, %v1481
        %v1483 = vadd.f32 %v1479, %v1482
        %vm1484 = vweird.f32 %v1479
        %v1485 = vsel %vm1484, %v1479, %v1483
        %v1486 = vmul.f32 %v1478, %v1485
        %v1487 = vsub.f32 %v1473, %v1486
        %v1488 = vmul.f32 %v1487, %v1487
        %v1489 = vsel %vm1256, %v1488, 0.0
        %1490 = vadd.xlane.f32.xlu0 %v1489
        %v1491 = vpop.xlane.xlu0 %1490
        %v1492 = vmul.f32 %v1491, %v1485
        %v1493 = vadd.f32 %v1492, 1e-12
        %v1494 = vrsqrt.pop %v1493
        %v1495 = vmul.f32 %v1494, %v1493
        %v1496 = vmul.f32 %v1495, %v1494
        %v1497 = vmul.f32 0.5, %v1496
        %v1498 = vsub.f32 1.5, %v1497
        %v1499 = vmul.f32 %v1494, %v1498
        %vm1500 = vweird.f32 %v1493
        %vm1501 = vweird.f32 %v1494
        %vm1502 = vmor %vm1500, %vm1501
        %v1503 = vsel %vm1502, %v1494, %v1499
        %v1504 = vmul.f32 %v1487, %v1503
        %v1506 = vperm.slane %v1474, 0
        %v1508 = vmul.f32 %v1504, %v1506
        %v1510 = vperm.slane %v1475, 0
        %v1512 = vadd.f32 %v1508, %v1510
        %v1513 = vpack.c.bf16 %v1512, %v1512
        %v1514 = vld [vmem:[%s1177] sm:$0xf]
        %v1515 = vld [vmem:[%s1177 + $0x4] sm:$0xf]
        %v1516 = vld [vmem:[%s1177 + $0x8] sm:$0xf]
        %v1517 = vld [vmem:[%s1177 + $0xc] sm:$0xf]
        %v1518 = vld [vmem:[%s991] sm:$0x1]
        %v1520 = vperm.slane %v1518, 0
        %v1526 = vunpack.c.l.b16 %v1514
        %v1527 = vunpack.c.l.b16 %v1515
        %v1528 = vunpack.c.l.b16 %v1516
        %v1529 = vunpack.c.l.b16 %v1517
        %v1530 = vpack.c.b16 %v1527, %v1526
        %v1531 = vpack.c.b16 %v1529, %v1528
        %v1535 = vsel %vm1256, %v1513, 0
        %1537 = vmatpush.bf16.msra.mxu0 0
        %1538 = vmatpush.bf16.msra.mxu0 0
        %1539 = vmatpush.bf16.msra.mxu0 0
        %1540 = vmatpush.bf16.msra.mxu0 0
        %1541 = vmatpush.bf16.msra.mxu0 0
        %1542 = vmatpush.bf16.msra.mxu0 0
        %1543 = vmatpush.bf16.msra.mxu0 %v1531
        %1544 = vmatpush.bf16.msra.mxu0 %v1530
        %1545 = vmatmul.bf16.gmra.mxu0 %v1535
        %v1546 = vpop.f32.mrf.mxu0
        %v1547 = vadd.f32 %v1520, %v1546
        %v1548 = vpop.f32.mrf.mxu0
        %1549 = vdwg.mxu0
        %v1550 = vmul.f32 %v1547, %v1547
        %v1551 = vmul.f32 %v1547, %v1550
        %v1552 = vmul.f32 %v1551, 0.044715
        %v1553 = vadd.f32 %v1547, %v1552
        %v1554 = vmul.f32 %v1553, 0.7978846
        %v1555 = vtanh.pop %v1554
        %v1556 = vadd.f32 %v1555, 1.0
        %v1557 = vmul.f32 %v1556, 0.5
        %v1558 = vmul.f32 %v1547, %v1557
        %v1559 = vpack.c.bf16 %v1558, %v1558
        %v1560 = vld [vmem:[%s1182] sm:$0xf]
        %v1561 = vld [vmem:[%s1182 + $0x4] sm:$0xf]
        %v1562 = vld [vmem:[%s1182 + $0x8] sm:$0xf]
        %v1563 = vld [vmem:[%s1182 + $0xc] sm:$0xf]
        %v1564 = vld [vmem:[%s1182 + $0x10] sm:$0xf]
        %v1565 = vld [vmem:[%s1182 + $0x14] sm:$0xf]
        %v1566 = vld [vmem:[%s1182 + $0x18] sm:$0xf]
        %v1567 = vld [vmem:[%s1182 + $0x1c] sm:$0xf]
        %v1568 = vld [vmem:[%s1000] sm:$0x1]
        %v1570 = vperm.slane %v1568, 0
        %v1580 = vunpack.c.l.b16 %v1560
        %v1581 = vunpack.c.l.b16 %v1561
        %v1582 = vunpack.c.l.b16 %v1562
        %v1583 = vunpack.c.l.b16 %v1563
        %v1584 = vunpack.c.l.b16 %v1564
        %v1585 = vunpack.c.l.b16 %v1565
        %v1586 = vunpack.c.l.b16 %v1566
        %v1587 = vunpack.c.l.b16 %v1567
        %v1588 = vpack.c.b16 %v1581, %v1580
        %v1589 = vpack.c.b16 %v1583, %v1582
        %v1590 = vpack.c.b16 %v1585, %v1584
        %v1591 = vpack.c.b16 %v1587, %v1586
        %vm1596 = vcmask 523264
        %v1598 = vsel %vm1596, %v1559, 0
        %1600 = vmatpush.bf16.msra.mxu0 0
        %1601 = vmatpush.bf16.msra.mxu0 0
        %1602 = vmatpush.bf16.msra.mxu0 0
        %1603 = vmatpush.bf16.msra.mxu0 0
        %1604 = vmatpush.bf16.msra.mxu0 %v1591
        %1605 = vmatpush.bf16.msra.mxu0 %v1590
        %1606 = vmatpush.bf16.msra.mxu0 %v1589
        %1607 = vmatpush.bf16.msra.mxu0 %v1588
        %1608 = vmatmul.bf16.gmra.mxu0 %v1598
        %v1609 = vpop.f32.mrf.mxu0
        %v1610 = vadd.f32 %v1570, %v1609
        %v1611 = vpop.f32.mrf.mxu0
        %1612 = vdwg.mxu0
        %v1613 = vadd.f32 %v1512, %v1610
        %v1614 = vld [vmem:[%s1009] sm:$0x1]
        %v1615 = vld [vmem:[%s1018] sm:$0x1]
        %v1616 = vsel %vm1256, %v1613, 0.0
        %1617 = vadd.xlane.f32.xlu0 %v1616
        %v1618 = vpop.xlane.xlu0 %1617
        %v1619 = vmul.f32 %v1618, %v1485
        %v1620 = vsub.f32 %v1613, %v1619
        %v1621 = vmul.f32 %v1620, %v1620
        %v1622 = vsel %vm1256, %v1621, 0.0
        %1623 = vadd.xlane.f32.xlu0 %v1622
        %v1624 = vpop.xlane.xlu0 %1623
        %v1625 = vmul.f32 %v1624, %v1485
        %v1626 = vadd.f32 %v1625, 1e-12
        %v1627 = vrsqrt.pop %v1626
        %v1628 = vmul.f32 %v1627, %v1626
        %v1629 = vmul.f32 %v1628, %v1627
        %v1630 = vmul.f32 0.5, %v1629
        %v1631 = vsub.f32 1.5, %v1630
        %v1632 = vmul.f32 %v1627, %v1631
        %vm1633 = vweird.f32 %v1626
        %vm1634 = vweird.f32 %v1627
        %vm1635 = vmor %vm1633, %vm1634
        %v1636 = vsel %vm1635, %v1627, %v1632
        %v1637 = vmul.f32 %v1620, %v1636
        %v1639 = vperm.slane %v1614, 0
        %v1641 = vmul.f32 %v1637, %v1639
        %v1643 = vperm.slane %v1615, 0
        %v1645 = vadd.f32 %v1641, %v1643
        %1646 = vst.msk [vmem:[#allocation2] sm:$0xff] %vm1256, %v1645
        %p1647 = scmp.eq.s32.totalorder %s58, 1
        // Predicated region
        $region169: #{tpu_custom_call.1} parent=115 // pred_check
          %p1648 = pneg %p1647
        $region170: #{tpu_custom_call.1} parent=115 // pred_check_branch
          %1650 = sbr.rel (%p1648) target = $region172
        $region171: #{tpu_custom_call.1} parent=115 // pred_region
          %v1651 = vpack.c.bf16 %v1645, %v1645
          %v1652 = vld [vmem:[%s1185] sm:$0x1]
          %v1653 = vld [vmem:[%s17] sm:$0xf]
          %v1654 = vld [vmem:[%s17 + $0x4] sm:$0xf]
          %v1655 = vld [vmem:[%s17 + $0x8] sm:$0xf]
          %v1656 = vld [vmem:[%s17 + $0xc] sm:$0xf]
          %v1657 = vld [vmem:[%s17 + $0x10] sm:$0xf]
          %v1658 = vld [vmem:[%s17 + $0x14] sm:$0xf]
          %v1659 = vld [vmem:[%s18] sm:$0x1]
          %v1666 = vunpack.c.l.b16 %v1653
          %v1667 = vunpack.c.l.b16 %v1654
          %v1668 = vunpack.c.l.b16 %v1655
          %v1669 = vunpack.c.l.b16 %v1656
          %v1670 = vunpack.c.l.b16 %v1657
          %v1671 = vunpack.c.l.b16 %v1658
          %v1672 = vpack.c.b16 %v1667, %v1666
          %v1673 = vpack.c.b16 %v1669, %v1668
          %v1674 = vpack.c.b16 %v1671, %v1670
          %vm1678 = vcmask 392192
          %v1680 = vsel %vm1678, %v1652, 0
          %1682 = vmatpush.bf16.msra.mxu0 0
          %1683 = vmatpush.bf16.msra.mxu0 0
          %1684 = vmatpush.bf16.msra.mxu0 0
          %1685 = vmatpush.bf16.msra.mxu0 0
          %1686 = vmatpush.bf16.msra.mxu0 0
          %1687 = vmatpush.bf16.msra.mxu0 %v1674
          %1688 = vmatpush.bf16.msra.mxu0 %v1673
          %1689 = vmatpush.bf16.msra.mxu0 %v1672
          %1690 = vmatmul.bf16.gmra.mxu0 %v1680
          %v1691 = vpop.f32.mrf.mxu0
          %v1692 = vadd.f32 %v1659, %v1691
          %v1693 = vpop.f32.mrf.mxu0
          %1694 = vdwg.mxu0
          %v1695 = vmax.f32 %v1692, 0.0
          %v1696 = vpack.c.bf16 %v1695, %v1695
          %v1697 = vld [vmem:[#allocation21] sm:$0xf]
          %v1698 = vld [vmem:[#allocation21 + $0x4] sm:$0xf]
          %v1699 = vld [vmem:[#allocation21 + $0x8] sm:$0xf]
          %v1700 = vld [vmem:[#allocation21 + $0xc] sm:$0xf]
          %v1701 = vld [vmem:[%s20] sm:$0x1]
          %v1706 = vunpack.c.l.b16 %v1697
          %v1707 = vunpack.c.l.b16 %v1698
          %v1708 = vunpack.c.l.b16 %v1699
          %v1709 = vunpack.c.l.b16 %v1700
          %v1710 = vpack.c.b16 %v1707, %v1706
          %v1711 = vpack.c.b16 %v1709, %v1708
          %v1715 = vsel %vm1256, %v1696, 0
          %1717 = vmatpush.bf16.msra.mxu0 0
          %1718 = vmatpush.bf16.msra.mxu0 0
          %1719 = vmatpush.bf16.msra.mxu0 0
          %1720 = vmatpush.bf16.msra.mxu0 0
          %1721 = vmatpush.bf16.msra.mxu0 0
          %1722 = vmatpush.bf16.msra.mxu0 0
          %1723 = vmatpush.bf16.msra.mxu0 %v1711
          %1724 = vmatpush.bf16.msra.mxu0 %v1710
          %1725 = vmatmul.bf16.gmra.mxu0 %v1715
          %v1726 = vpop.f32.mrf.mxu0
          %v1727 = vadd.f32 %v1701, %v1726
          %v1728 = vpop.f32.mrf.mxu0
          %1729 = vdwg.mxu0
          %v1730 = vld [vmem:[#allocation23] sm:$0xf]
          %v1731 = vld [vmem:[#allocation23 + $0x4] sm:$0xf]
          %v1732 = vld [vmem:[#allocation23 + $0x8] sm:$0xf]
          %v1733 = vld [vmem:[#allocation23 + $0xc] sm:$0xf]
          %v1734 = vpack.c.bf16 %v1727, %v1727
          %v1735 = vld [vmem:[#allocation24] sm:$0xf]
          %v1736 = vld [vmem:[#allocation24 + $0x4] sm:$0xf]
          %v1737 = vld [vmem:[#allocation24 + $0x8] sm:$0xf]
          %v1738 = vld [vmem:[#allocation24 + $0xc] sm:$0xf]
          %v1743 = vunpack.c.l.b16 %v1735
          %v1744 = vunpack.c.l.b16 %v1736
          %v1745 = vunpack.c.l.b16 %v1737
          %v1746 = vunpack.c.l.b16 %v1738
          %v1747 = vpack.c.b16 %v1744, %v1743
          %v1748 = vpack.c.b16 %v1746, %v1745
          %v1752 = vsel %vm1256, %v1734, 0
          %1754 = vmatpush.bf16.msra.mxu0 0
          %1755 = vmatpush.bf16.msra.mxu0 0
          %1756 = vmatpush.bf16.msra.mxu0 0
          %1757 = vmatpush.bf16.msra.mxu0 0
          %1758 = vmatpush.bf16.msra.mxu0 0
          %1759 = vmatpush.bf16.msra.mxu0 0
          %1760 = vmatpush.bf16.msra.mxu0 %v1748
          %1761 = vmatpush.bf16.msra.mxu0 %v1747
          %1762 = vmatmul.bf16.gmra.mxu0 %v1752
          %v1763 = vpop.f32.mrf.mxu0
          %v1764 = vadd.f32 0.0, %v1763
          %v1765 = vpop.f32.mrf.mxu0
          %1766 = vdwg.mxu0
          %v1767 = vperm.slane %v1764, 0
          %v1772 = vunpack.c.l.b16 %v1730
          %v1773 = vunpack.c.l.b16 %v1731
          %v1774 = vunpack.c.l.b16 %v1732
          %v1775 = vunpack.c.l.b16 %v1733
          %v1776 = vpack.c.b16 %v1773, %v1772
          %v1777 = vpack.c.b16 %v1775, %v1774
          %v1781 = vsel %vm1256, %v1651, 0
          %1783 = vmatpush.bf16.msra.mxu0 0
          %1784 = vmatpush.bf16.msra.mxu0 0
          %1785 = vmatpush.bf16.msra.mxu0 0
          %1786 = vmatpush.bf16.msra.mxu0 0
          %1787 = vmatpush.bf16.msra.mxu0 0
          %1788 = vmatpush.bf16.msra.mxu0 0
          %1789 = vmatpush.bf16.msra.mxu0 %v1777
          %1790 = vmatpush.bf16.msra.mxu0 %v1776
          %1791 = vmatmul.bf16.gmra.mxu0 %v1781
          %v1792 = vpop.f32.mrf.mxu0
          %v1793 = vadd.f32 %v1767, %v1792
          %v1794 = vpop.f32.mrf.mxu0
          %1795 = vdwg.mxu0
          %v1796 = vld [vmem:[%s23] sm:$0x1]
          %v1798 = vperm.slane %v1796, 0
          %v1800 = vadd.f32 %v1793, %v1798
          %1801 = vst [vmem:[%s1155] sm:$0xff] %v1800
        $region172: #{tpu_custom_call.1} parent=115 // pred_fallthru
          _
        %s1802 = sand.u32 %s652, 1
        %s1803 = scalar_lea.sflag [#allocation8], %s1802
        %s1804 = sand.u32 %s652, 1
        %s1805 = smul.addr %s1804, 8
        %s1806 = scalar_lea.vmem [#allocation26], %s1805
        // Predicated region
        $region173: #{tpu_custom_call.1} parent=115 // pred_check
          %p1807 = pneg %p662
        $region174: #{tpu_custom_call.1} parent=115 // pred_check_branch
          %1809 = sbr.rel (%p1807) target = $region176
        $region175: #{tpu_custom_call.1} parent=115 // pred_region
          %1811 = vsyncadd %s1803, 0
          %s1812 = smul.addr %s57, 8
          %s1813 = scalar_lea.hbm %s24, %s1812
          %s1815 = sshll.u32 %s1806, 4
          %s1816 = int_to_ptr.vmem [resolvable:$true] %s1815
          %s1817 = sshll.u32 %s1813, 4
          %s1818 = int_to_ptr.hbm [resolvable:$true] %s1817
          %1820 = dma.vmem_to_hbm [thread:$0]  %s1816, 128, %s1818, %s1803
        $region176: #{tpu_custom_call.1} parent=115 // pred_fallthru
          _
      $region116: #{tpu_custom_call.1} parent=5 // pred_fallthru
        _
      %p1821 = scmp.le.s32.totalorder 2, %s48
      // Predicated region
      $region177: #{tpu_custom_call.1} parent=5 // pred_check
        %p1822 = pneg %p1821
      $region178: #{tpu_custom_call.1} parent=5 // pred_check_branch
        %1824 = sbr.rel (%p1822) target = $region180
      $region179: #{tpu_custom_call.1} parent=5 // pred_region
        %s1825 = ssub.s32 %s48, 2
        // Predicated region
        $region181: #{tpu_custom_call.1} parent=179 // pred_check
          %p1826 = pneg %p668
        $region182: #{tpu_custom_call.1} parent=179 // pred_check_branch
          %1828 = sbr.rel (%p1826) target = $region184
        $region183: #{tpu_custom_call.1} parent=179 // pred_region
          %s1829 = sand.u32 %s653, 1
          %s1830 = scalar_lea.sflag [#allocation8], %s1829
          %s1831 = sand.u32 %s653, 1
          %s1832 = smul.addr %s1831, 8
          %s1833 = scalar_lea.vmem [#allocation26], %s1832
          %1835 = dma.done %s1830, 128
        $region184: #{tpu_custom_call.1} parent=179 // pred_fallthru
          _
      $region180: #{tpu_custom_call.1} parent=5 // pred_fallthru
        _
    $region6: #{tpu_custom_call.1} parent=1 // loop_footer
      %s52 = sadd.s32 1, %s48
    $region7: #{tpu_custom_call.1} parent=1 // loop_footer_branch
      %47 = sbr.rel target = $region3
    $region8: #{tpu_custom_call.1} parent=1 // loop_exit
      _
    %1836 = vsyncpa [#allocation7], 1
    %s1837 = scalar_lea.sflag [#allocation7], 1
    %1838 = vsyncpa %s1837, 1
    %1839 = vsyncpa [#allocation10], 1
    %s1840 = scalar_lea.sflag [#allocation10], 1
    %1841 = vsyncpa %s1840, 1
    %1842 = vsyncpa [#allocation13], 1
    %s1843 = scalar_lea.sflag [#allocation13], 1
    %1844 = vsyncpa %s1843, 1
    %1845 = vsyncpa [#allocation16], 1
    %s1846 = scalar_lea.sflag [#allocation16], 1
    %1847 = vsyncpa %s1846, 1
    %1848 = vsyncpa [#allocation19], 1
    %s1849 = scalar_lea.sflag [#allocation19], 1
    %1850 = vsyncpa %s1849, 1
    %1851 = vsyncpa [#allocation22], 1
    %1852 = vsyncpa [#allocation25], 1
    %1853 = vsyncpa [#allocation8], 1
    %s1854 = scalar_lea.sflag [#allocation8], 1
    %1855 = vsyncpa %s1854, 1

</llo_original>
